<compile_context>
chip_gen: v6e
topology: v6e:2x2x1
jax: 0.10.0
libtpu: 0.0.40
codegen_flags: <defaults>
</compile_context>

<pallas_src>
import numpy as np
import jax
import jax.numpy as jnp
from jax import lax
from jax.experimental import pallas as pl
from jax.experimental.pallas import tpu as pltpu

EPSILON = 1e-4  # PPNet distance_2_similarity epsilon


# ----------------------------------------------------------------------------
# Fused kernel: backbone 3x3 conv (im2col matmul) + add-on 1x1 conv + sigmoid
#               + prototype L2 distances + spatial min / sum reductions.
# ----------------------------------------------------------------------------
def _ppnet_kernel(pat_ref, w1_ref, b1_ref, w2_ref, b2_ref, pT_ref, p2_ref,
                  min_ref, sum_ref, min_acc, sum_acc):
    t = pl.program_id(1)

    @pl.when(t == 0)
    def _():
        min_acc[...] = jnp.full_like(min_acc, jnp.inf)
        sum_acc[...] = jnp.zeros_like(sum_acc)

    # backbone 3x3 conv as matmul over im2col patches (bf16 inputs, f32 acc), ReLU
    f1 = jnp.dot(pat_ref[...], w1_ref[...],
                 preferred_element_type=jnp.float32) + b1_ref[...]
    f1 = jnp.maximum(f1, 0.0)
    # add-on 1x1 conv + sigmoid
    f2 = jnp.dot(f1.astype(jnp.bfloat16), w2_ref[...],
                 preferred_element_type=jnp.float32) + b2_ref[...]
    f2 = jax.nn.sigmoid(f2)
    # L2 "prototype conv": dist[m, p] = ||f2[m] - proto[p]||^2
    x_sq = jnp.sum(f2 * f2, axis=-1, keepdims=True)                  # (TM, 1)
    xp = jnp.dot(f2.astype(jnp.bfloat16), pT_ref[...],
                 preferred_element_type=jnp.float32)                 # (TM, Kpad)
    dist = jnp.maximum(x_sq - 2.0 * xp + p2_ref[...], 0.0)

    # spatial reductions accumulated in VMEM scratch (lane-dense, Kpad lanes)
    min_acc[...] = jnp.minimum(min_acc[...], jnp.min(dist, axis=0, keepdims=True))
    sum_acc[...] = sum_acc[...] + jnp.sum(dist, axis=0, keepdims=True)

    @pl.when(t == pl.num_programs(1) - 1)
    def _():
        min_ref[0] = min_acc[...]
        sum_ref[0] = sum_acc[...]


def ppnet_adversarial_forward(x, img, mask, params, proto_nums,
                              focal_sim=False, tm=None):
    """Returns (output of shape (1, 1), max_activations of shape (N, Ksel))."""
    N, C, H, W = x.shape
    w1, b1, w2, b2, protos = (params["w1"], params["b1"], params["w2"],
                              params["b2"], params["protos"])
    D = w1.shape[0]
    D2 = w2.shape[1]
    Ksel = len(proto_nums)
    Kpad = ((Ksel + 127) // 128) * 128          # lane-dense output width
    HW = H * W
    if tm is None:
        tm = min(HW, 512)                       # big tiles: few grid steps
    tm = min(tm, HW)
    assert HW % tm == 0
    tiles = HW // tm
    K1 = C * 9

    # ---- glue (plain JAX; fused by XLA, no extra pallas_call) --------------
    # adversarial blend with implicit broadcasting of img / mask
    x2 = x * mask + img * (1.0 - mask)
    # im2col patch matrix (N*H*W, C*9).
    # TODO(synk): for production image sizes build the 3x3 patches inside the
    # kernel from shifted views of a resident (HW, C) feature map instead of
    # materializing the 9x im2col matrix in HBM.
    xpad = jnp.pad(x2, ((0, 0), (0, 0), (1, 1), (1, 1)))
    cols = [xpad[:, :, kh:kh + H, kw:kw + W] for kh in range(3) for kw in range(3)]
    pat = jnp.stack(cols, axis=2)                               # (N, C, 9, H, W)
    pat = pat.transpose(0, 3, 4, 1, 2).reshape(N * HW, K1)
    pat = pat.astype(jnp.bfloat16)                              # MXU-native inputs

    w1_mat = w1.reshape(D, K1).T.astype(jnp.bfloat16)           # (C*9, D)
    w2_b = w2.astype(jnp.bfloat16)                              # (D, D2)
    b1_r = b1[None, :].astype(jnp.float32)
    b2_r = b2[None, :].astype(jnp.float32)
    protos_sel = protos[jnp.asarray(proto_nums)]                # (Ksel, D2) f32
    pT = jnp.zeros((D2, Kpad), jnp.bfloat16)
    pT = pT.at[:, :Ksel].set(protos_sel.T.astype(jnp.bfloat16))
    p2 = jnp.zeros((1, Kpad), jnp.float32)
    p2 = p2.at[:, :Ksel].set(jnp.sum(protos_sel * protos_sel, axis=1)[None, :])

    # Weight operands are grid-invariant and tiny here, so default double
    # buffering costs only a few KB of VMEM; for large weights consider
    # pipeline_mode=pl.Buffered(1) to free VMEM headroom (esp. v7x, 64 MiB).
    out_sds = jax.ShapeDtypeStruct((N, 1, Kpad), jnp.float32)
    kern = pl.pallas_call(
        _ppnet_kernel,
        out_shape=(out_sds, out_sds),
        grid_spec=pltpu.PrefetchScalarGridSpec(
            num_scalar_prefetch=0,
            grid=(N, tiles),
            in_specs=[
                pl.BlockSpec((tm, K1), lambda n, t: (n * tiles + t, 0)),
                pl.BlockSpec((K1, D), lambda n, t: (0, 0)),
                pl.BlockSpec((1, D), lambda n, t: (0, 0)),
                pl.BlockSpec((D, D2), lambda n, t: (0, 0)),
                pl.BlockSpec((1, D2), lambda n, t: (0, 0)),
                pl.BlockSpec((D2, Kpad), lambda n, t: (0, 0)),
                pl.BlockSpec((1, Kpad), lambda n, t: (0, 0)),
            ],
            out_specs=(
                pl.BlockSpec((1, 1, Kpad), lambda n, t: (n, 0, 0)),
                pl.BlockSpec((1, 1, Kpad), lambda n, t: (n, 0, 0)),
            ),
            scratch_shapes=[pltpu.VMEM((1, Kpad), jnp.float32),
                            pltpu.VMEM((1, Kpad), jnp.float32)],
        ),
        compiler_params=pltpu.CompilerParams(
            dimension_semantics=("parallel", "arbitrary")),
    )
    min_out, sum_out = kern(pat, w1_mat, b1_r, w2_b, b2_r, pT, p2)
    min_dist = min_out[:, 0, :Ksel]     # (N, Ksel)
    sum_dist = sum_out[:, 0, :Ksel]     # (N, Ksel)

    d2s = lambda d: jnp.log((d + 1.0) / (d + EPSILON))
    # d2s is strictly decreasing => max over space of similarity == d2s(min dist)
    max_act = d2s(min_dist)             # == max_activations, shape (N, Ksel)
    if focal_sim:
        mean_dist = sum_dist / HW
        sim_diff = max_act - d2s(mean_dist)
        return jnp.mean(sim_diff).reshape(1, 1), max_act
    return jnp.mean(max_act).reshape(1, 1), max_act


# ----------------------------------------------------------------------------
# Pure-JAX reference (no Pallas, f32/HIGHEST) for validation
# ----------------------------------------------------------------------------
def reference_forward(x, img, mask, params, proto_nums, focal_sim=False):
    w1, b1, w2, b2, protos = (params["w1"], params["b1"], params["w2"],
                              params["b2"], params["protos"])
    N = x.shape[0]
    Ksel = len(proto_nums)
    x2 = x * mask + img * (1.0 - mask)
    f = lax.conv_general_dilated(
        x2, w1, window_strides=(1, 1), padding="SAME",
        dimension_numbers=("NCHW", "OIHW", "NCHW"),
        precision=lax.Precision.HIGHEST)
    f = jnp.maximum(f + b1[None, :, None, None], 0.0)
    g = jnp.einsum("nchw,cd->ndhw", f, w2,
                   precision=lax.Precision.HIGHEST) + b2[None, :, None, None]
    g = jax.nn.sigmoid(g)
    x_sq = jnp.sum(g * g, axis=1, keepdims=True)
    xp = jnp.einsum("nchw,pc->nphw", g, protos, precision=lax.Precision.HIGHEST)
    p2 = jnp.sum(protos * protos, axis=1)[None, :, None, None]
    dist = jnp.maximum(x_sq - 2.0 * xp + p2, 0.0)
    dist = dist[:, jnp.asarray(proto_nums)]
    d2s = lambda d: jnp.log((d + 1.0) / (d + EPSILON))
    acts = d2s(dist).reshape(N, Ksel, -1)
    max_act = jnp.max(acts, axis=-1)
    if focal_sim:
        dflat = dist.reshape(N, Ksel, -1)
        sim_diff = d2s(jnp.min(dflat, axis=-1)) - d2s(jnp.mean(dflat, axis=-1))
        return jnp.mean(sim_diff).reshape(1, 1), max_act
    return jnp.mean(max_act).reshape(1, 1), max_act


if __name__ == "__main__":
    key = jax.random.PRNGKey(0)
    N, C, H, W = 2, 4, 16, 16      # x: (2, 4, 16, 16), NCHW
    D, D2, P = 32, 64, 10          # backbone channels, prototype dim, #prototypes
    proto_nums = np.array([1, 3, 6, 9], dtype=np.int32)

    ks = jax.random.split(key, 8)
    x = jax.random.normal(ks[0], (N, C, H, W), jnp.float32)
    img = jax.random.normal(ks[1], (1, C, H, W), jnp.float32)
    mask = (jax.random.uniform(ks[2], (1, 1, H, W)) > 0.5).astype(jnp.float32)
    params = dict(
        w1=0.1 * jax.random.normal(ks[3], (D, C, 3, 3), jnp.float32),
        b1=0.05 * jax.random.normal(ks[4], (D,), jnp.float32),
        w2=0.1 * jax.random.normal(ks[5], (D, D2), jnp.float32),
        b2=0.05 * jax.random.normal(ks[6], (D2,), jnp.float32),
        protos=0.3 * jax.random.uniform(ks[7], (P, D2), jnp.float32),
    )

    fwd = jax.jit(ppnet_adversarial_forward, static_argnames=("focal_sim", "tm"))

    for focal in (False, True):
        out, max_act = fwd(x, img, mask, params, proto_nums, focal_sim=focal)
        out = jax.block_until_ready(out)
        ref_out, ref_max = reference_forward(
            x, img, mask, params, proto_nums, focal_sim=focal)
        assert out.shape == (1, 1)
        # bf16 matmul inputs (f32 accumulation) -> bf16-appropriate tolerances
        np.testing.assert_allclose(np.asarray(out), np.asarray(ref_out),
                                   rtol=2e-2, atol=5e-3)
        np.testing.assert_allclose(np.asarray(max_act), np.asarray(ref_max),
                                   rtol=2e-2, atol=2e-3)

    print("KERNEL_OK")
</pallas_src>

<mosaic_0001>
module attributes {stable_mosaic.version = 11 : i64} {
  func.func @_ppnet_kernel(%arg0: i32, %arg1: i32, %arg2: memref<256x36xbf16, #tpu.memory_space<vmem>>, %arg3: memref<36x32xbf16, #tpu.memory_space<vmem>>, %arg4: memref<1x32xf32, #tpu.memory_space<vmem>>, %arg5: memref<32x64xbf16, #tpu.memory_space<vmem>>, %arg6: memref<1x64xf32, #tpu.memory_space<vmem>>, %arg7: memref<64x128xbf16, #tpu.memory_space<vmem>>, %arg8: memref<1x128xf32, #tpu.memory_space<vmem>>, %arg9: memref<1x1x128xf32, #tpu.memory_space<vmem>>, %arg10: memref<1x1x128xf32, #tpu.memory_space<vmem>>, %arg11: memref<1x128xf32, #tpu.memory_space<vmem>>, %arg12: memref<1x128xf32, #tpu.memory_space<vmem>>) attributes {dimension_semantics = [#tpu.dimension_semantics<parallel>, #tpu.dimension_semantics<arbitrary>], iteration_bounds = array<i64: 2, 1>, scalar_prefetch = 0 : i64, scratch_operands = 2 : i64, tpu.core_type = #tpu.core_type<tc>, window_params = [{transform_indices = @transform_0, window_bounds = array<i64: 256, 36>}, {pipeline_mode = #tpu.pipeline_mode<synchronous>, transform_indices = @transform_1, window_bounds = array<i64: 36, 32>}, {pipeline_mode = #tpu.pipeline_mode<synchronous>, transform_indices = @transform_2, window_bounds = array<i64: 1, 32>}, {pipeline_mode = #tpu.pipeline_mode<synchronous>, transform_indices = @transform_3, window_bounds = array<i64: 32, 64>}, {pipeline_mode = #tpu.pipeline_mode<synchronous>, transform_indices = @transform_4, window_bounds = array<i64: 1, 64>}, {pipeline_mode = #tpu.pipeline_mode<synchronous>, transform_indices = @transform_5, window_bounds = array<i64: 64, 128>}, {pipeline_mode = #tpu.pipeline_mode<synchronous>, transform_indices = @transform_6, window_bounds = array<i64: 1, 128>}, {transform_indices = @transform_7, window_bounds = array<i64: 1, 1, 128>}, {transform_indices = @transform_8, window_bounds = array<i64: 1, 1, 128>}]} {
    %c0_i32 = arith.constant 0 : i32
    %0 = arith.cmpi eq, %arg1, %c0_i32 : i32
    %1 = arith.extui %0 : i1 to i32
    %c0_i32_0 = arith.constant 0 : i32
    %2 = arith.cmpi ne, %1, %c0_i32_0 : i32
    scf.if %2 {
      %cst_33 = arith.constant 0x7F800000 : f32
      %50 = vector.broadcast %cst_33 : f32 to vector<1x128xf32>
      %c0_34 = arith.constant 0 : index
      %c0_35 = arith.constant 0 : index
      %51 = vector.load %arg11[%c0_34, %c0_35] : memref<1x128xf32, #tpu.memory_space<vmem>>, vector<1x128xf32>
      tpu.vector_store %arg11[%c0_34, %c0_35], %50 {strides = array<i32>} : memref<1x128xf32, #tpu.memory_space<vmem>>, vector<1x128xf32>,
      %cst_36 = arith.constant 0.000000e+00 : f32
      %52 = vector.broadcast %cst_36 : f32 to vector<1x128xf32>
      %c0_37 = arith.constant 0 : index
      %c0_38 = arith.constant 0 : index
      %53 = vector.load %arg12[%c0_37, %c0_38] : memref<1x128xf32, #tpu.memory_space<vmem>>, vector<1x128xf32>
      tpu.vector_store %arg12[%c0_37, %c0_38], %52 {strides = array<i32>} : memref<1x128xf32, #tpu.memory_space<vmem>>, vector<1x128xf32>,
    } else {
    }
    %c0 = arith.constant 0 : index
    %c0_1 = arith.constant 0 : index
    %3 = vector.load %arg2[%c0, %c0_1] : memref<256x36xbf16, #tpu.memory_space<vmem>>, vector<256x36xbf16>
    %c0_2 = arith.constant 0 : index
    %c0_3 = arith.constant 0 : index
    %4 = vector.load %arg3[%c0_2, %c0_3] : memref<36x32xbf16, #tpu.memory_space<vmem>>, vector<36x32xbf16>
    %cst = arith.constant dense<0.000000e+00> : vector<256x32xf32>
    %5 = tpu.matmul %3, %4, %cst {dimension_numbers = #tpu.dot_dimension_numbers<[1], [0], [0], [1], [0, 0, 1, 1], [], []>} : vector<256x36xbf16>, vector<36x32xbf16>, vector<256x32xf32> -> vector<256x32xf32>
    %c0_4 = arith.constant 0 : index
    %c0_5 = arith.constant 0 : index
    %6 = vector.load %arg4[%c0_4, %c0_5] : memref<1x32xf32, #tpu.memory_space<vmem>>, vector<1x32xf32>
    %7 = vector.broadcast %6 : vector<1x32xf32> to vector<256x32xf32>
    %8 = arith.addf %5, %7 : vector<256x32xf32>
    %cst_6 = arith.constant 0.000000e+00 : f32
    %9 = vector.broadcast %cst_6 : f32 to vector<256x32xf32>
    %10 = arith.maximumf %8, %9 : vector<256x32xf32>
    %11 = arith.truncf %10 : vector<256x32xf32> to vector<256x32xbf16>
    %c0_7 = arith.constant 0 : index
    %c0_8 = arith.constant 0 : index
    %12 = vector.load %arg5[%c0_7, %c0_8] : memref<32x64xbf16, #tpu.memory_space<vmem>>, vector<32x64xbf16>
    %cst_9 = arith.constant dense<0.000000e+00> : vector<256x64xf32>
    %13 = tpu.matmul %11, %12, %cst_9 {dimension_numbers = #tpu.dot_dimension_numbers<[1], [0], [0], [1], [0, 0, 1, 1], [], []>} : vector<256x32xbf16>, vector<32x64xbf16>, vector<256x64xf32> -> vector<256x64xf32>
    %c0_10 = arith.constant 0 : index
    %c0_11 = arith.constant 0 : index
    %14 = vector.load %arg6[%c0_10, %c0_11] : memref<1x64xf32, #tpu.memory_space<vmem>>, vector<1x64xf32>
    %15 = vector.broadcast %14 : vector<1x64xf32> to vector<256x64xf32>
    %16 = arith.addf %13, %15 : vector<256x64xf32>
    %17 = arith.negf %16 : vector<256x64xf32>
    %18 = math.exp %17 : vector<256x64xf32>
    %cst_12 = arith.constant 1.000000e+00 : f32
    %19 = vector.broadcast %cst_12 : f32 to vector<256x64xf32>
    %20 = arith.addf %19, %18 : vector<256x64xf32>
    %21 = arith.divf %19, %20 : vector<256x64xf32>
    %22 = arith.mulf %21, %21 : vector<256x64xf32>
    %cst_13 = arith.constant dense<0.000000e+00> : vector<256xf32>
    %23 = vector.multi_reduction <add>, %22, %cst_13 [1] : vector<256x64xf32> to vector<256xf32>
    %24 = vector.shape_cast %23 : vector<256xf32> to vector<256x1xf32>
    %25 = arith.truncf %21 : vector<256x64xf32> to vector<256x64xbf16>
    %c0_14 = arith.constant 0 : index
    %c0_15 = arith.constant 0 : index
    %26 = vector.load %arg7[%c0_14, %c0_15] : memref<64x128xbf16, #tpu.memory_space<vmem>>, vector<64x128xbf16>
    %cst_16 = arith.constant dense<0.000000e+00> : vector<256x128xf32>
    %27 = tpu.matmul %25, %26, %cst_16 {dimension_numbers = #tpu.dot_dimension_numbers<[1], [0], [0], [1], [0, 0, 1, 1], [], []>} : vector<256x64xbf16>, vector<64x128xbf16>, vector<256x128xf32> -> vector<256x128xf32>
    %cst_17 = arith.constant 2.000000e+00 : f32
    %28 = vector.broadcast %cst_17 : f32 to vector<256x128xf32>
    %29 = arith.mulf %28, %27 : vector<256x128xf32>
    %30 = vector.broadcast %24 : vector<256x1xf32> to vector<256x128xf32>
    %31 = arith.subf %30, %29 : vector<256x128xf32>
    %c0_18 = arith.constant 0 : index
    %c0_19 = arith.constant 0 : index
    %32 = vector.load %arg8[%c0_18, %c0_19] : memref<1x128xf32, #tpu.memory_space<vmem>>, vector<1x128xf32>
    %33 = vector.broadcast %32 : vector<1x128xf32> to vector<256x128xf32>
    %34 = arith.addf %31, %33 : vector<256x128xf32>
    %cst_20 = arith.constant 0.000000e+00 : f32
    %35 = vector.broadcast %cst_20 : f32 to vector<256x128xf32>
    %36 = arith.maximumf %34, %35 : vector<256x128xf32>
    %c0_21 = arith.constant 0 : index
    %c0_22 = arith.constant 0 : index
    %37 = vector.load %arg11[%c0_21, %c0_22] : memref<1x128xf32, #tpu.memory_space<vmem>>, vector<1x128xf32>
    %cst_23 = arith.constant dense<0x7F800000> : vector<128xf32>
    %38 = vector.multi_reduction <minimumf>, %36, %cst_23 [0] : vector<256x128xf32> to vector<128xf32>
    %39 = vector.shape_cast %38 : vector<128xf32> to vector<1x128xf32>
    %40 = arith.minimumf %37, %39 : vector<1x128xf32>
    %c0_24 = arith.constant 0 : index
    %c0_25 = arith.constant 0 : index
    %41 = vector.load %arg11[%c0_24, %c0_25] : memref<1x128xf32, #tpu.memory_space<vmem>>, vector<1x128xf32>
    tpu.vector_store %arg11[%c0_24, %c0_25], %40 {strides = array<i32>} : memref<1x128xf32, #tpu.memory_space<vmem>>, vector<1x128xf32>,
    %c0_26 = arith.constant 0 : index
    %c0_27 = arith.constant 0 : index
    %42 = vector.load %arg12[%c0_26, %c0_27] : memref<1x128xf32, #tpu.memory_space<vmem>>, vector<1x128xf32>
    %cst_28 = arith.constant dense<0.000000e+00> : vector<128xf32>
    %43 = vector.multi_reduction <add>, %36, %cst_28 [0] : vector<256x128xf32> to vector<128xf32>
    %44 = vector.shape_cast %43 : vector<128xf32> to vector<1x128xf32>
    %45 = arith.addf %42, %44 : vector<1x128xf32>
    %c0_29 = arith.constant 0 : index
    %c0_30 = arith.constant 0 : index
    %46 = vector.load %arg12[%c0_29, %c0_30] : memref<1x128xf32, #tpu.memory_space<vmem>>, vector<1x128xf32>
    tpu.vector_store %arg12[%c0_29, %c0_30], %45 {strides = array<i32>} : memref<1x128xf32, #tpu.memory_space<vmem>>, vector<1x128xf32>,
    %c0_i32_31 = arith.constant 0 : i32
    %47 = arith.cmpi eq, %arg1, %c0_i32_31 : i32
    %48 = arith.extui %47 : i1 to i32
    %c0_i32_32 = arith.constant 0 : i32
    %49 = arith.cmpi ne, %48, %c0_i32_32 : i32
    scf.if %49 {
      %c0_33 = arith.constant 0 : index
      %c0_34 = arith.constant 0 : index
      %50 = vector.load %arg11[%c0_33, %c0_34] : memref<1x128xf32, #tpu.memory_space<vmem>>, vector<1x128xf32>
      %c0_35 = arith.constant 0 : index
      %c0_36 = arith.constant 0 : index
      %c0_37 = arith.constant 0 : index
      %51 = vector.load %arg9[%c0_35, %c0_36, %c0_37] : memref<1x1x128xf32, #tpu.memory_space<vmem>>, vector<1x1x128xf32>
      %52 = vector.shape_cast %51 : vector<1x1x128xf32> to vector<1x128xf32>
      %53 = vector.shape_cast %50 : vector<1x128xf32> to vector<1x1x128xf32>
      tpu.vector_store %arg9[%c0_35, %c0_36, %c0_37], %53 {strides = array<i32>} : memref<1x1x128xf32, #tpu.memory_space<vmem>>, vector<1x1x128xf32>,
      %c0_38 = arith.constant 0 : index
      %c0_39 = arith.constant 0 : index
      %54 = vector.load %arg12[%c0_38, %c0_39] : memref<1x128xf32, #tpu.memory_space<vmem>>, vector<1x128xf32>
      %c0_40 = arith.constant 0 : index
      %c0_41 = arith.constant 0 : index
      %c0_42 = arith.constant 0 : index
      %55 = vector.load %arg10[%c0_40, %c0_41, %c0_42] : memref<1x1x128xf32, #tpu.memory_space<vmem>>, vector<1x1x128xf32>
      %56 = vector.shape_cast %55 : vector<1x1x128xf32> to vector<1x128xf32>
      %57 = vector.shape_cast %54 : vector<1x128xf32> to vector<1x1x128xf32>
      tpu.vector_store %arg10[%c0_40, %c0_41, %c0_42], %57 {strides = array<i32>} : memref<1x1x128xf32, #tpu.memory_space<vmem>>, vector<1x1x128xf32>,
    } else {
    }
    return
  }
  func.func @transform_0(%arg0: i32, %arg1: i32) -> (i32, i32) {
    %c1_i32 = arith.constant 1 : i32
    %0 = arith.muli %arg0, %c1_i32 : i32
    %1 = arith.addi %0, %arg1 : i32
    %c0_i32 = arith.constant 0 : i32
    %c0_i32_0 = arith.constant 0 : i32
    return %1, %c0_i32 : i32, i32
  }
  func.func @transform_1(%arg0: i32, %arg1: i32) -> (i32, i32) {
    %c0_i32 = arith.constant 0 : i32
    %c0_i32_0 = arith.constant 0 : i32
    %c0_i32_1 = arith.constant 0 : i32
    return %c0_i32, %c0_i32_0 : i32, i32
  }
  func.func @transform_2(%arg0: i32, %arg1: i32) -> (i32, i32) {
    %c0_i32 = arith.constant 0 : i32
    %c0_i32_0 = arith.constant 0 : i32
    %c0_i32_1 = arith.constant 0 : i32
    return %c0_i32, %c0_i32_0 : i32, i32
  }
  func.func @transform_3(%arg0: i32, %arg1: i32) -> (i32, i32) {
    %c0_i32 = arith.constant 0 : i32
    %c0_i32_0 = arith.constant 0 : i32
    %c0_i32_1 = arith.constant 0 : i32
    return %c0_i32, %c0_i32_0 : i32, i32
  }
  func.func @transform_4(%arg0: i32, %arg1: i32) -> (i32, i32) {
    %c0_i32 = arith.constant 0 : i32
    %c0_i32_0 = arith.constant 0 : i32
    %c0_i32_1 = arith.constant 0 : i32
    return %c0_i32, %c0_i32_0 : i32, i32
  }
  func.func @transform_5(%arg0: i32, %arg1: i32) -> (i32, i32) {
    %c0_i32 = arith.constant 0 : i32
    %c0_i32_0 = arith.constant 0 : i32
    %c0_i32_1 = arith.constant 0 : i32
    return %c0_i32, %c0_i32_0 : i32, i32
  }
  func.func @transform_6(%arg0: i32, %arg1: i32) -> (i32, i32) {
    %c0_i32 = arith.constant 0 : i32
    %c0_i32_0 = arith.constant 0 : i32
    %c0_i32_1 = arith.constant 0 : i32
    return %c0_i32, %c0_i32_0 : i32, i32
  }
  func.func @transform_7(%arg0: i32, %arg1: i32) -> (i32, i32, i32) {
    %c0_i32 = arith.constant 0 : i32
    %c0_i32_0 = arith.constant 0 : i32
    %c0_i32_1 = arith.constant 0 : i32
    return %arg0, %c0_i32, %c0_i32_0 : i32, i32, i32
  }
  func.func @transform_8(%arg0: i32, %arg1: i32) -> (i32, i32, i32) {
    %c0_i32 = arith.constant 0 : i32
    %c0_i32_0 = arith.constant 0 : i32
    %c0_i32_1 = arith.constant 0 : i32
    return %arg0, %c0_i32, %c0_i32_0 : i32, i32, i32
  }
}

</mosaic_0001>

<llo_original>
// kernel: ppnet_adversarial_forward.1
$region0: #{ppnet_adversarial_forward.1}
  #allocation0 [shape = 'u32[]', space=smem, size = 0x4, offset = 0x4, fixed_abs, tag = 'smem constant byte address 0x4 - core index']
  #allocation1 [shape = 'u32[144,128]{1,0:T(1,128)}', space=vmem, size = 0x12000, scoped, tag = 'internal scratch']
  #allocation2 [shape = 'f32[1,128]{1,0:T(1,128)}', space=vmem, size = 0x200, scoped, tag = 'scratch operand']
  #allocation3 [shape = 'f32[1,128]{1,0:T(1,128)}', space=vmem, size = 0x200, scoped, tag = 'scratch operand']
  %s0 = inlined_call_operand.vmem [shape: bf16[512,36], index: 0, kind: input, shape index: {}]
  %s1 = inlined_call_operand.vmem [shape: bf16[36,32], index: 1, kind: input, shape index: {}]
  %s2 = inlined_call_operand.vmem [shape: f32[1,32], index: 2, kind: input, shape index: {}]
  %s3 = inlined_call_operand.vmem [shape: bf16[32,64], index: 3, kind: input, shape index: {}]
  %s4 = inlined_call_operand.vmem [shape: f32[1,64], index: 4, kind: input, shape index: {}]
  %s5 = inlined_call_operand.vmem [shape: bf16[64,128], index: 5, kind: input, shape index: {}]
  %s6 = inlined_call_operand.vmem [shape: f32[1,128], index: 6, kind: input, shape index: {}]
  %s7 = inlined_call_operand.vmem [shape: f32[2,1,128], index: 7, kind: output, shape index: {0}]
  %s8 = inlined_call_operand.hbm [shape: f32[2,1,128], index: 8, kind: output, shape index: {1}]
  %9 = xla_tuple %s7, %s8
  %s10 = sld [smem:[#allocation0]]
  $region77: #{ppnet_adversarial_forward.1} parent=0
    _
  %s12 = ssub.s32 1, %s10
  %s13 = scalar_select 0, %s12, %s10
  $region1: #{ppnet_adversarial_forward.1} parent=0
    #allocation4 [shape = 'u8[1024]{0}', space=vmem, size = 0x400, scoped, tag = 'output window, operand 1']
    #allocation5 [shape = 's32[2]{0}', space=sflag, size = 0x8, scoped, tag = 'scoped memory for ppnet_adversarial_forward.1']
    %14 = vsyncpa [#allocation5], 0
    %s15 = scalar_lea.sflag [#allocation5], 1
    %16 = vsyncpa %s15, 0
    loop: start=0, step=1, limit=4
    $region2: #{ppnet_adversarial_forward.1} parent=1 // loop_pre_header
      _
    $region3: #{ppnet_adversarial_forward.1} parent=1 // loop_header
      %s18 = sphi 0, %s22
      %p19 = scmp.ge.s32.totalorder %s18, 4
      %s25 = sphi 0, %s37
      %s26 = sphi 0, %s33
      %s27 = sphi 0, %s25
      %s28 = sphi 0, %s26
      %s29 = sphi 0, %s27
      %s30 = sphi 0, %s28
      %s42 = sphi 0, %s44
      %s45 = sphi 0, %s42
      %s46 = sphi 0, %s45
      %s62 = sphi 0, %s46
      %s66 = sphi 0, %s66
      %s68 = sphi 0, %s66
      %s69 = sphi 0, %s68
      %s83 = sphi 0, %s69
      %s87 = sphi 0, %s87
      %s89 = sphi 0, %s87
      %s90 = sphi 0, %s89
      %s104 = sphi 0, %s90
      %s108 = sphi 0, %s108
      %s110 = sphi 0, %s108
      %s111 = sphi 0, %s110
      %s125 = sphi 0, %s111
      %s129 = sphi 0, %s129
      %s131 = sphi 0, %s129
      %s132 = sphi 0, %s131
      %s146 = sphi 0, %s132
      %s150 = sphi 0, %s150
      %s152 = sphi 0, %s150
      %s153 = sphi 0, %s152
      %s167 = sphi 0, %s153
      %s171 = sphi 0, %s171
      %s173 = sphi 0, %s171
      %s174 = sphi 0, %s173
      %s188 = sphi 0, %s174
      %s194 = sphi 0, %s196
      %s197 = sphi 0, %s194
      %s198 = sphi 0, %s197
      %s214 = sphi 0, %s198
      %s220 = sphi 0, %s222
      %s223 = sphi 0, %s220
      %s224 = sphi 0, %s223
      %s240 = sphi 0, %s224
    $region4: #{ppnet_adversarial_forward.1} parent=1 // loop_header_branch
      %21 = sbr.rel (%p19) target = $region8
    $region5: #{ppnet_adversarial_forward.1} parent=1 // loop_body
      %s23 = ssub.s32 %s18, 1
      %s24 = ssub.s32 %s18, 2
      %s31 = sadd.s32 1, %s26
      %p32 = scmp.ge.s32.totalorder %s31, 1
      %s33 = scalar_select %p32, 0, %s31
      %s34 = sadd.s32 1, %s25
      %s35 = scalar_select %p32, %s34, %s25
      %p36 = scmp.ge.s32.totalorder %s35, 2
      %s37 = scalar_select %p36, 0, %s35
      %s38 = sadd.s32 %s25, %s26
      %s39 = sadd.s32 %s37, %s33
      %s40 = ssub.s32 %s38, %s39
      %p41 = scmp.eq.s32.totalorder %s40, 0
      %s43 = sadd.s32 %s42, 1
      %s44 = scalar_select %p41, %s42, %s43
      %p47 = pneg %p41
      %p48 = scmp.eq.s32.totalorder %s18, 1
      %p49 = por %p47, %p48
      %p50 = scmp.ne.s32.totalorder %s42, %s45
      %p51 = scmp.eq.s32.totalorder %s18, 0
      %p52 = por %p50, %p51
      %p53 = scmp.ne.s32.totalorder %s42, %s45
      %p54 = scmp.eq.s32.totalorder %s23, 1
      %p55 = por %p53, %p54
      %p56 = scmp.ne.s32.totalorder %s45, %s46
      %p57 = scmp.eq.s32.totalorder %s23, 0
      %p58 = por %p56, %p57
      %p59 = scmp.ne.s32.totalorder %s45, %s46
      %p60 = scmp.eq.s32.totalorder %s24, 1
      %p61 = por %p59, %p60
      %p63 = scmp.ne.s32.totalorder %s46, %s62
      %p64 = scmp.eq.s32.totalorder %s24, 0
      %p65 = por %p63, %p64
      %s67 = sadd.s32 %s66, 1
      %p70 = scmp.eq.s32.totalorder %s18, 1
      %p71 = scmp.ne.s32.totalorder %s66, %s68
      %p72 = scmp.eq.s32.totalorder %s18, 0
      %p73 = por %p71, %p72
      %p74 = scmp.ne.s32.totalorder %s66, %s68
      %p75 = scmp.eq.s32.totalorder %s23, 1
      %p76 = por %p74, %p75
      %p77 = scmp.ne.s32.totalorder %s68, %s69
      %p78 = scmp.eq.s32.totalorder %s23, 0
      %p79 = por %p77, %p78
      %p80 = scmp.ne.s32.totalorder %s68, %s69
      %p81 = scmp.eq.s32.totalorder %s24, 1
      %p82 = por %p80, %p81
      %p84 = scmp.ne.s32.totalorder %s69, %s83
      %p85 = scmp.eq.s32.totalorder %s24, 0
      %p86 = por %p84, %p85
      %s88 = sadd.s32 %s87, 1
      %p91 = scmp.eq.s32.totalorder %s18, 1
      %p92 = scmp.ne.s32.totalorder %s87, %s89
      %p93 = scmp.eq.s32.totalorder %s18, 0
      %p94 = por %p92, %p93
      %p95 = scmp.ne.s32.totalorder %s87, %s89
      %p96 = scmp.eq.s32.totalorder %s23, 1
      %p97 = por %p95, %p96
      %p98 = scmp.ne.s32.totalorder %s89, %s90
      %p99 = scmp.eq.s32.totalorder %s23, 0
      %p100 = por %p98, %p99
      %p101 = scmp.ne.s32.totalorder %s89, %s90
      %p102 = scmp.eq.s32.totalorder %s24, 1
      %p103 = por %p101, %p102
      %p105 = scmp.ne.s32.totalorder %s90, %s104
      %p106 = scmp.eq.s32.totalorder %s24, 0
      %p107 = por %p105, %p106
      %s109 = sadd.s32 %s108, 1
      %p112 = scmp.eq.s32.totalorder %s18, 1
      %p113 = scmp.ne.s32.totalorder %s108, %s110
      %p114 = scmp.eq.s32.totalorder %s18, 0
      %p115 = por %p113, %p114
      %p116 = scmp.ne.s32.totalorder %s108, %s110
      %p117 = scmp.eq.s32.totalorder %s23, 1
      %p118 = por %p116, %p117
      %p119 = scmp.ne.s32.totalorder %s110, %s111
      %p120 = scmp.eq.s32.totalorder %s23, 0
      %p121 = por %p119, %p120
      %p122 = scmp.ne.s32.totalorder %s110, %s111
      %p123 = scmp.eq.s32.totalorder %s24, 1
      %p124 = por %p122, %p123
      %p126 = scmp.ne.s32.totalorder %s111, %s125
      %p127 = scmp.eq.s32.totalorder %s24, 0
      %p128 = por %p126, %p127
      %s130 = sadd.s32 %s129, 1
      %p133 = scmp.eq.s32.totalorder %s18, 1
      %p134 = scmp.ne.s32.totalorder %s129, %s131
      %p135 = scmp.eq.s32.totalorder %s18, 0
      %p136 = por %p134, %p135
      %p137 = scmp.ne.s32.totalorder %s129, %s131
      %p138 = scmp.eq.s32.totalorder %s23, 1
      %p139 = por %p137, %p138
      %p140 = scmp.ne.s32.totalorder %s131, %s132
      %p141 = scmp.eq.s32.totalorder %s23, 0
      %p142 = por %p140, %p141
      %p143 = scmp.ne.s32.totalorder %s131, %s132
      %p144 = scmp.eq.s32.totalorder %s24, 1
      %p145 = por %p143, %p144
      %p147 = scmp.ne.s32.totalorder %s132, %s146
      %p148 = scmp.eq.s32.totalorder %s24, 0
      %p149 = por %p147, %p148
      %s151 = sadd.s32 %s150, 1
      %p154 = scmp.eq.s32.totalorder %s18, 1
      %p155 = scmp.ne.s32.totalorder %s150, %s152
      %p156 = scmp.eq.s32.totalorder %s18, 0
      %p157 = por %p155, %p156
      %p158 = scmp.ne.s32.totalorder %s150, %s152
      %p159 = scmp.eq.s32.totalorder %s23, 1
      %p160 = por %p158, %p159
      %p161 = scmp.ne.s32.totalorder %s152, %s153
      %p162 = scmp.eq.s32.totalorder %s23, 0
      %p163 = por %p161, %p162
      %p164 = scmp.ne.s32.totalorder %s152, %s153
      %p165 = scmp.eq.s32.totalorder %s24, 1
      %p166 = por %p164, %p165
      %p168 = scmp.ne.s32.totalorder %s153, %s167
      %p169 = scmp.eq.s32.totalorder %s24, 0
      %p170 = por %p168, %p169
      %s172 = sadd.s32 %s171, 1
      %p175 = scmp.eq.s32.totalorder %s18, 1
      %p176 = scmp.ne.s32.totalorder %s171, %s173
      %p177 = scmp.eq.s32.totalorder %s18, 0
      %p178 = por %p176, %p177
      %p179 = scmp.ne.s32.totalorder %s171, %s173
      %p180 = scmp.eq.s32.totalorder %s23, 1
      %p181 = por %p179, %p180
      %p182 = scmp.ne.s32.totalorder %s173, %s174
      %p183 = scmp.eq.s32.totalorder %s23, 0
      %p184 = por %p182, %p183
      %p185 = scmp.ne.s32.totalorder %s173, %s174
      %p186 = scmp.eq.s32.totalorder %s24, 1
      %p187 = por %p185, %p186
      %p189 = scmp.ne.s32.totalorder %s174, %s188
      %p190 = scmp.eq.s32.totalorder %s24, 0
      %p191 = por %p189, %p190
      %s192 = ssub.s32 %s25, %s37
      %p193 = scmp.eq.s32.totalorder %s192, 0
      %s195 = sadd.s32 %s194, 1
      %s196 = scalar_select %p193, %s194, %s195
      %p199 = pneg %p193
      %p200 = scmp.eq.s32.totalorder %s18, 1
      %p201 = por %p199, %p200
      %p202 = scmp.ne.s32.totalorder %s194, %s197
      %p203 = scmp.eq.s32.totalorder %s18, 0
      %p204 = por %p202, %p203
      %p205 = scmp.ne.s32.totalorder %s194, %s197
      %p206 = scmp.eq.s32.totalorder %s23, 1
      %p207 = por %p205, %p206
      %p208 = scmp.ne.s32.totalorder %s197, %s198
      %p209 = scmp.eq.s32.totalorder %s23, 0
      %p210 = por %p208, %p209
      %p211 = scmp.ne.s32.totalorder %s197, %s198
      %p212 = scmp.eq.s32.totalorder %s24, 1
      %p213 = por %p211, %p212
      %p215 = scmp.ne.s32.totalorder %s198, %s214
      %p216 = scmp.eq.s32.totalorder %s24, 0
      %p217 = por %p215, %p216
      %s218 = ssub.s32 %s25, %s37
      %p219 = scmp.eq.s32.totalorder %s218, 0
      %s221 = sadd.s32 %s220, 1
      %s222 = scalar_select %p219, %s220, %s221
      %p225 = pneg %p219
      %p226 = scmp.eq.s32.totalorder %s18, 1
      %p227 = por %p225, %p226
      %p228 = scmp.ne.s32.totalorder %s220, %s223
      %p229 = scmp.eq.s32.totalorder %s18, 0
      %p230 = por %p228, %p229
      %p231 = scmp.ne.s32.totalorder %s220, %s223
      %p232 = scmp.eq.s32.totalorder %s23, 1
      %p233 = por %p231, %p232
      %p234 = scmp.ne.s32.totalorder %s223, %s224
      %p235 = scmp.eq.s32.totalorder %s23, 0
      %p236 = por %p234, %p235
      %p237 = scmp.ne.s32.totalorder %s223, %s224
      %p238 = scmp.eq.s32.totalorder %s24, 1
      %p239 = por %p237, %p238
      %p241 = scmp.ne.s32.totalorder %s224, %s240
      %p242 = scmp.eq.s32.totalorder %s24, 0
      %p243 = por %p241, %p242
      %p244 = scmp.le.s32.totalorder 1, %s18
      %p245 = scmp.lt.s32.totalorder %s18, 3
      %p246 = pnand %p244, %p245
      %p247 = pneg %p246
      // Predicated region
      $region9: #{ppnet_adversarial_forward.1} parent=5 // pred_check
        _
      $region10: #{ppnet_adversarial_forward.1} parent=5 // pred_check_branch
        %249 = sbr.rel (%p246) target = $region12
      $region11: #{ppnet_adversarial_forward.1} parent=5 // pred_region
        %s250 = ssub.s32 %s18, 1
        // Predicated region
        $region13: #{ppnet_adversarial_forward.1} parent=11 // pred_check
          %p251 = pneg %p79
        $region14: #{ppnet_adversarial_forward.1} parent=11 // pred_check_branch
          %253 = sbr.rel (%p251) target = $region16
        $region15: #{ppnet_adversarial_forward.1} parent=11 // pred_region
          _
        $region16: #{ppnet_adversarial_forward.1} parent=11 // pred_fallthru
          _
        // Predicated region
        $region17: #{ppnet_adversarial_forward.1} parent=11 // pred_check
          %p254 = pneg %p100
        $region18: #{ppnet_adversarial_forward.1} parent=11 // pred_check_branch
          %256 = sbr.rel (%p254) target = $region20
        $region19: #{ppnet_adversarial_forward.1} parent=11 // pred_region
          _
        $region20: #{ppnet_adversarial_forward.1} parent=11 // pred_fallthru
          _
        // Predicated region
        $region21: #{ppnet_adversarial_forward.1} parent=11 // pred_check
          %p257 = pneg %p121
        $region22: #{ppnet_adversarial_forward.1} parent=11 // pred_check_branch
          %259 = sbr.rel (%p257) target = $region24
        $region23: #{ppnet_adversarial_forward.1} parent=11 // pred_region
          _
        $region24: #{ppnet_adversarial_forward.1} parent=11 // pred_fallthru
          _
        // Predicated region
        $region25: #{ppnet_adversarial_forward.1} parent=11 // pred_check
          %p260 = pneg %p142
        $region26: #{ppnet_adversarial_forward.1} parent=11 // pred_check_branch
          %262 = sbr.rel (%p260) target = $region28
        $region27: #{ppnet_adversarial_forward.1} parent=11 // pred_region
          _
        $region28: #{ppnet_adversarial_forward.1} parent=11 // pred_fallthru
          _
        // Predicated region
        $region29: #{ppnet_adversarial_forward.1} parent=11 // pred_check
          %p263 = pneg %p163
        $region30: #{ppnet_adversarial_forward.1} parent=11 // pred_check_branch
          %265 = sbr.rel (%p263) target = $region32
        $region31: #{ppnet_adversarial_forward.1} parent=11 // pred_region
          _
        $region32: #{ppnet_adversarial_forward.1} parent=11 // pred_fallthru
          _
        // Predicated region
        $region33: #{ppnet_adversarial_forward.1} parent=11 // pred_check
          %p266 = pneg %p184
        $region34: #{ppnet_adversarial_forward.1} parent=11 // pred_check_branch
          %268 = sbr.rel (%p266) target = $region36
        $region35: #{ppnet_adversarial_forward.1} parent=11 // pred_region
          _
        $region36: #{ppnet_adversarial_forward.1} parent=11 // pred_fallthru
          _
      $region12: #{ppnet_adversarial_forward.1} parent=5 // pred_fallthru
        _
      %p269 = scmp.lt.s32.totalorder %s18, 2
      // Predicated region
      $region37: #{ppnet_adversarial_forward.1} parent=5 // pred_check
        %p270 = pneg %p269
      $region38: #{ppnet_adversarial_forward.1} parent=5 // pred_check_branch
        %272 = sbr.rel (%p270) target = $region40
      $region39: #{ppnet_adversarial_forward.1} parent=5 // pred_region
        // Predicated region
        $region41: #{ppnet_adversarial_forward.1} parent=39 // pred_check
          %p273 = pneg %p52
        $region42: #{ppnet_adversarial_forward.1} parent=39 // pred_check_branch
          %275 = sbr.rel (%p273) target = $region44
        $region43: #{ppnet_adversarial_forward.1} parent=39 // pred_region
          %s276 = sadd.s32 %s25, %s26
          %s277 = smul.u32 32, %s276
          %p278 = scmp.lt.s32.totalorder %s277, 63
          %s279 = scalar_select %p278, %s277, 63
          %s280 = smul.addr %s279, 4
          %s281 = scalar_lea.vmem %s0, %s280
          %s282 = sadd.s32 %s25, %s26
          %s283 = smul.u32 32, %s282
        $region44: #{ppnet_adversarial_forward.1} parent=39 // pred_fallthru
          _
      $region40: #{ppnet_adversarial_forward.1} parent=5 // pred_fallthru
        _
      %p284 = scmp.le.s32.totalorder 1, %s18
      %p285 = scmp.lt.s32.totalorder %s18, 3
      %p286 = pnand %p284, %p285
      %p287 = pneg %p286
      // Predicated region
      $region45: #{ppnet_adversarial_forward.1} parent=5 // pred_check
        _
      $region46: #{ppnet_adversarial_forward.1} parent=5 // pred_check_branch
        %289 = sbr.rel (%p286) target = $region48
      $region47: #{ppnet_adversarial_forward.1} parent=5 // pred_region
        %s290 = ssub.s32 %s18, 1
        %s291 = sadd.s32 %s27, %s28
        %s292 = smul.u32 32, %s291
        %p293 = scmp.lt.s32.totalorder %s292, 63
        %s294 = scalar_select %p293, %s292, 63
        %s295 = smul.addr %s294, 4
        %s296 = scalar_lea.vmem %s0, %s295
        %p297 = pneg %p58
        %p298 = pneg %p55
        %p299 = pneg %p79
        %p300 = pneg %p76
        %p301 = pneg %p100
        %p302 = pneg %p97
        %p303 = pneg %p121
        %p304 = pneg %p118
        %p305 = pneg %p142
        %p306 = pneg %p139
        %p307 = pneg %p163
        %p308 = pneg %p160
        %p309 = pneg %p184
        %p310 = pneg %p181
        %p311 = pneg %p210
        %p312 = pneg %p207
        %p313 = scmp.lt.s32.totalorder %s27, 1
        %s314 = scalar_select %p313, %s27, 1
        %s315 = scalar_lea.vmem %s7, %s314
        %p316 = pneg %p236
        %p317 = pneg %p233
        %s318 = sand.u32 %s223, 1
        %s319 = scalar_lea.sflag [#allocation5], %s318
        %s320 = sand.u32 %s223, 1
        %s321 = scalar_lea.vmem [#allocation4], %s320
        %s322 = sadd.s32 %s27, %s28
        %s323 = smul.u32 32, %s322
        %p324 = scmp.lt.s32.totalorder %s323, 63
        %s325 = scalar_select %p324, %s323, 63
        %s326 = smul.addr %s325, 4
        %s327 = scalar_lea.vmem %s0, %s326
        %s328 = sadd.s32 %s27, %s28
        %s329 = smul.u32 32, %s328
        %p330 = scmp.lt.s32.totalorder %s27, 1
        %s331 = scalar_select %p330, %s27, 1
        %s332 = scalar_lea.vmem %s7, %s331
        %p334 = scmp.eq.s32.totalorder %s28, 0
        // Predicated region
        $region49: #{ppnet_adversarial_forward.1} parent=47 // pred_check
          %p335 = pneg %p334
        $region50: #{ppnet_adversarial_forward.1} parent=47 // pred_check_branch
          %337 = sbr.rel (%p335) target = $region52
        $region51: #{ppnet_adversarial_forward.1} parent=47 // pred_region
          %338 = vst [vmem:[#allocation2] sm:$0x1] inf
          %339 = vst [vmem:[#allocation3] sm:$0x1] 0.0
        $region52: #{ppnet_adversarial_forward.1} parent=47 // pred_fallthru
          _
        %v340 = vld [vmem:[%s327] sm:$0xf]
        %v341 = vld [vmem:[%s327 + $0x4] sm:$0xf]
        %v342 = vld [vmem:[%s327 + $0x8] sm:$0xf]
        %v343 = vld [vmem:[%s327 + $0xc] sm:$0xf]
        %v344 = vld [vmem:[%s327 + $0x10] sm:$0xf]
        %v345 = vld [vmem:[%s327 + $0x14] sm:$0xf]
        %v346 = vld [vmem:[%s327 + $0x18] sm:$0xf]
        %v347 = vld [vmem:[%s327 + $0x1c] sm:$0xf]
        %v348 = vld [vmem:[%s327 + $0x20] sm:$0xf]
        %v349 = vld [vmem:[%s327 + $0x24] sm:$0xf]
        %v350 = vld [vmem:[%s327 + $0x28] sm:$0xf]
        %v351 = vld [vmem:[%s327 + $0x2c] sm:$0xf]
        %v352 = vld [vmem:[%s327 + $0x30] sm:$0xf]
        %v353 = vld [vmem:[%s327 + $0x34] sm:$0xf]
        %v354 = vld [vmem:[%s327 + $0x38] sm:$0xf]
        %v355 = vld [vmem:[%s327 + $0x3c] sm:$0xf]
        %v356 = vld [vmem:[%s327 + $0x40] sm:$0xf]
        %v357 = vld [vmem:[%s327 + $0x44] sm:$0xf]
        %v358 = vld [vmem:[%s327 + $0x48] sm:$0xf]
        %v359 = vld [vmem:[%s327 + $0x4c] sm:$0xf]
        %v360 = vld [vmem:[%s327 + $0x50] sm:$0xf]
        %v361 = vld [vmem:[%s327 + $0x54] sm:$0xf]
        %v362 = vld [vmem:[%s327 + $0x58] sm:$0xf]
        %v363 = vld [vmem:[%s327 + $0x5c] sm:$0xf]
        %v364 = vld [vmem:[%s327 + $0x60] sm:$0xf]
        %v365 = vld [vmem:[%s327 + $0x64] sm:$0xf]
        %v366 = vld [vmem:[%s327 + $0x68] sm:$0xf]
        %v367 = vld [vmem:[%s327 + $0x6c] sm:$0xf]
        %v368 = vld [vmem:[%s327 + $0x70] sm:$0xf]
        %v369 = vld [vmem:[%s327 + $0x74] sm:$0xf]
        %v370 = vld [vmem:[%s327 + $0x78] sm:$0xf]
        %v371 = vld [vmem:[%s327 + $0x7c] sm:$0xf]
        %v372 = vld [vmem:[%s1] sm:$0xf]
        %v373 = vld [vmem:[%s1 + $0x4] sm:$0xf]
        %v374 = vld [vmem:[%s1 + $0x8] sm:$0xf]
        %v375 = vld [vmem:[%s1 + $0xc] sm:$0xf]
        %v376 = vld [vmem:[%s1 + $0x10] sm:$0x3]
        %v377 = vld [vmem:[%s2] sm:$0x1]
        %v379 = vlaneseq
        %v380 = vshrl.u32 %v379, 7
        %v381 = vsub.s32 0, %v380
        %v382 = vrot.slane %v377, %v381
        %v416 = vunpack.c.l.b16 %v340
        %v417 = vunpack.c.l.b16 %v341
        %v418 = vunpack.c.l.b16 %v342
        %v419 = vunpack.c.l.b16 %v343
        %v420 = vunpack.c.l.b16 %v344
        %v421 = vunpack.c.l.b16 %v345
        %v422 = vunpack.c.l.b16 %v346
        %v423 = vunpack.c.l.b16 %v347
        %v424 = vunpack.c.l.b16 %v348
        %v425 = vunpack.c.l.b16 %v349
        %v426 = vunpack.c.l.b16 %v350
        %v427 = vunpack.c.l.b16 %v351
        %v428 = vunpack.c.l.b16 %v352
        %v429 = vunpack.c.l.b16 %v353
        %v430 = vunpack.c.l.b16 %v354
        %v431 = vunpack.c.l.b16 %v355
        %v432 = vunpack.c.l.b16 %v356
        %v433 = vunpack.c.l.b16 %v357
        %v434 = vunpack.c.l.b16 %v358
        %v435 = vunpack.c.l.b16 %v359
        %v436 = vunpack.c.l.b16 %v360
        %v437 = vunpack.c.l.b16 %v361
        %v438 = vunpack.c.l.b16 %v362
        %v439 = vunpack.c.l.b16 %v363
        %v440 = vunpack.c.l.b16 %v364
        %v441 = vunpack.c.l.b16 %v365
        %v442 = vunpack.c.l.b16 %v366
        %v443 = vunpack.c.l.b16 %v367
        %v444 = vunpack.c.l.b16 %v368
        %v445 = vunpack.c.l.b16 %v369
        %v446 = vunpack.c.l.b16 %v370
        %v447 = vunpack.c.l.b16 %v371
        %v448 = vpack.c.b16 %v417, %v416
        %v449 = vpack.c.b16 %v419, %v418
        %v450 = vpack.c.b16 %v421, %v420
        %v451 = vpack.c.b16 %v423, %v422
        %v452 = vpack.c.b16 %v425, %v424
        %v453 = vpack.c.b16 %v427, %v426
        %v454 = vpack.c.b16 %v429, %v428
        %v455 = vpack.c.b16 %v431, %v430
        %v456 = vpack.c.b16 %v433, %v432
        %v457 = vpack.c.b16 %v435, %v434
        %v458 = vpack.c.b16 %v437, %v436
        %v459 = vpack.c.b16 %v439, %v438
        %v460 = vpack.c.b16 %v441, %v440
        %v461 = vpack.c.b16 %v443, %v442
        %v462 = vpack.c.b16 %v445, %v444
        %v463 = vpack.c.b16 %v447, %v446
        %v469 = vunpack.c.l.b16 %v372
        %v470 = vunpack.c.l.b16 %v373
        %v471 = vunpack.c.l.b16 %v374
        %v472 = vunpack.c.l.b16 %v375
        %v473 = vunpack.c.l.b16 %v376
        %v474 = vpack.c.b16 %v470, %v469
        %v475 = vpack.c.b16 %v472, %v471
        %v476 = vpack.c.b16 %v473, %v473
        %vm479 = vcmask 293888
        %v481 = vsel %vm479, %v448, 0
        %v484 = vsel %vm479, %v449, 0
        %v487 = vsel %vm479, %v450, 0
        %v490 = vsel %vm479, %v451, 0
        %v493 = vsel %vm479, %v452, 0
        %v496 = vsel %vm479, %v453, 0
        %v499 = vsel %vm479, %v454, 0
        %v502 = vsel %vm479, %v455, 0
        %v505 = vsel %vm479, %v456, 0
        %v508 = vsel %vm479, %v457, 0
        %v511 = vsel %vm479, %v458, 0
        %v514 = vsel %vm479, %v459, 0
        %v517 = vsel %vm479, %v460, 0
        %v520 = vsel %vm479, %v461, 0
        %v523 = vsel %vm479, %v462, 0
        %v526 = vsel %vm479, %v463, 0
        %vm528 = vcmask 1041408
        %v530 = vsel %vm528, %v476, 0
        %532 = vmatprep.subr.bf16.mxu0 0
        %533 = vmatpush1.bf16.msra.mxu0 0
        %534 = vmatprep.subr.bf16.mxu0 0
        %535 = vmatpush1.bf16.msra.mxu0 0
        %536 = vmatprep.subr.bf16.mxu0 0
        %537 = vmatpush1.bf16.msra.mxu0 0
        %538 = vmatprep.subr.bf16.mxu0 0
        %539 = vmatpush1.bf16.msra.mxu0 0
        %540 = vmatprep.subr.bf16.mxu0 0
        %541 = vmatpush1.bf16.msra.mxu0 0
        %542 = vmatprep.subr.bf16.mxu0 0
        %543 = vmatpush1.bf16.msra.mxu0 %v530
        %544 = vmatprep.subr.bf16.mxu0 0
        %545 = vmatpush1.bf16.msra.mxu0 %v475
        %546 = vmatprep.subr.bf16.mxu0 0
        %547 = vmatpush1.bf16.msra.mxu0 %v474
        %548 = vmatprep.subr.bf16.mxu0 0
        %549 = vmatpush2.bf16.msra.mxu0 0
        %550 = vmatprep.subr.bf16.mxu0 0
        %551 = vmatpush2.bf16.msra.mxu0 0
        %552 = vmatprep.subr.bf16.mxu0 0
        %553 = vmatpush2.bf16.msra.mxu0 0
        %554 = vmatprep.subr.bf16.mxu0 0
        %555 = vmatpush2.bf16.msra.mxu0 0
        %556 = vmatprep.subr.bf16.mxu0 0
        %557 = vmatpush2.bf16.msra.mxu0 0
        %558 = vmatprep.subr.bf16.mxu0 0
        %559 = vmatpush2.bf16.msra.mxu0 0
        %560 = vmatprep.subr.bf16.mxu0 0
        %561 = vmatpush2.bf16.msra.mxu0 0
        %562 = vmatprep.subr.bf16.mxu0 0
        %563 = vmatpush2.bf16.msra.mxu0 0
        %564 = vmatprep.mubr.bf16.mxu0 0
        %565 = vmatmul.mubr.bf16.gmra.mxu0 %v481
        %v566 = vpop.f32.mrf.mxu0
        %v567 = vadd.f32 %v382, %v566
        %v568 = vpop.f32.mrf.mxu0
        %v569 = vpop.f32.mrf.mxu0
        %v570 = vadd.f32 %v382, %v569
        %v571 = vpop.f32.mrf.mxu0
        %572 = vmatprep.mubr.bf16.mxu0 0
        %573 = vmatmul.mubr.bf16.gmra.mxu0 %v484
        %v574 = vpop.f32.mrf.mxu0
        %v575 = vadd.f32 %v382, %v574
        %v576 = vpop.f32.mrf.mxu0
        %v577 = vpop.f32.mrf.mxu0
        %v578 = vadd.f32 %v382, %v577
        %v579 = vpop.f32.mrf.mxu0
        %580 = vmatprep.mubr.bf16.mxu0 0
        %581 = vmatmul.mubr.bf16.gmra.mxu0 %v487
        %v582 = vpop.f32.mrf.mxu0
        %v583 = vadd.f32 %v382, %v582
        %v584 = vpop.f32.mrf.mxu0
        %v585 = vpop.f32.mrf.mxu0
        %v586 = vadd.f32 %v382, %v585
        %v587 = vpop.f32.mrf.mxu0
        %588 = vmatprep.mubr.bf16.mxu0 0
        %589 = vmatmul.mubr.bf16.gmra.mxu0 %v490
        %v590 = vpop.f32.mrf.mxu0
        %v591 = vadd.f32 %v382, %v590
        %v592 = vpop.f32.mrf.mxu0
        %v593 = vpop.f32.mrf.mxu0
        %v594 = vadd.f32 %v382, %v593
        %v595 = vpop.f32.mrf.mxu0
        %596 = vmatprep.mubr.bf16.mxu0 0
        %597 = vmatmul.mubr.bf16.gmra.mxu0 %v493
        %v598 = vpop.f32.mrf.mxu0
        %v599 = vadd.f32 %v382, %v598
        %v600 = vpop.f32.mrf.mxu0
        %v601 = vpop.f32.mrf.mxu0
        %v602 = vadd.f32 %v382, %v601
        %v603 = vpop.f32.mrf.mxu0
        %604 = vmatprep.mubr.bf16.mxu0 0
        %605 = vmatmul.mubr.bf16.gmra.mxu0 %v496
        %v606 = vpop.f32.mrf.mxu0
        %v607 = vadd.f32 %v382, %v606
        %v608 = vpop.f32.mrf.mxu0
        %v609 = vpop.f32.mrf.mxu0
        %v610 = vadd.f32 %v382, %v609
        %v611 = vpop.f32.mrf.mxu0
        %612 = vmatprep.mubr.bf16.mxu0 0
        %613 = vmatmul.mubr.bf16.gmra.mxu0 %v499
        %v614 = vpop.f32.mrf.mxu0
        %v615 = vadd.f32 %v382, %v614
        %v616 = vpop.f32.mrf.mxu0
        %v617 = vpop.f32.mrf.mxu0
        %v618 = vadd.f32 %v382, %v617
        %v619 = vpop.f32.mrf.mxu0
        %620 = vmatprep.mubr.bf16.mxu0 0
        %621 = vmatmul.mubr.bf16.gmra.mxu0 %v502
        %v622 = vpop.f32.mrf.mxu0
        %v623 = vadd.f32 %v382, %v622
        %v624 = vpop.f32.mrf.mxu0
        %v625 = vpop.f32.mrf.mxu0
        %v626 = vadd.f32 %v382, %v625
        %v627 = vpop.f32.mrf.mxu0
        %628 = vmatprep.mubr.bf16.mxu0 0
        %629 = vmatmul.mubr.bf16.gmra.mxu0 %v505
        %v630 = vpop.f32.mrf.mxu0
        %v631 = vadd.f32 %v382, %v630
        %v632 = vpop.f32.mrf.mxu0
        %v633 = vpop.f32.mrf.mxu0
        %v634 = vadd.f32 %v382, %v633
        %v635 = vpop.f32.mrf.mxu0
        %636 = vmatprep.mubr.bf16.mxu0 0
        %637 = vmatmul.mubr.bf16.gmra.mxu0 %v508
        %v638 = vpop.f32.mrf.mxu0
        %v639 = vadd.f32 %v382, %v638
        %v640 = vpop.f32.mrf.mxu0
        %v641 = vpop.f32.mrf.mxu0
        %v642 = vadd.f32 %v382, %v641
        %v643 = vpop.f32.mrf.mxu0
        %644 = vmatprep.mubr.bf16.mxu0 0
        %645 = vmatmul.mubr.bf16.gmra.mxu0 %v511
        %v646 = vpop.f32.mrf.mxu0
        %v647 = vadd.f32 %v382, %v646
        %v648 = vpop.f32.mrf.mxu0
        %v649 = vpop.f32.mrf.mxu0
        %v650 = vadd.f32 %v382, %v649
        %v651 = vpop.f32.mrf.mxu0
        %652 = vmatprep.mubr.bf16.mxu0 0
        %653 = vmatmul.mubr.bf16.gmra.mxu0 %v514
        %v654 = vpop.f32.mrf.mxu0
        %v655 = vadd.f32 %v382, %v654
        %v656 = vpop.f32.mrf.mxu0
        %v657 = vpop.f32.mrf.mxu0
        %v658 = vadd.f32 %v382, %v657
        %v659 = vpop.f32.mrf.mxu0
        %660 = vmatprep.mubr.bf16.mxu0 0
        %661 = vmatmul.mubr.bf16.gmra.mxu0 %v517
        %v662 = vpop.f32.mrf.mxu0
        %v663 = vadd.f32 %v382, %v662
        %v664 = vpop.f32.mrf.mxu0
        %v665 = vpop.f32.mrf.mxu0
        %v666 = vadd.f32 %v382, %v665
        %v667 = vpop.f32.mrf.mxu0
        %668 = vmatprep.mubr.bf16.mxu0 0
        %669 = vmatmul.mubr.bf16.gmra.mxu0 %v520
        %v670 = vpop.f32.mrf.mxu0
        %v671 = vadd.f32 %v382, %v670
        %v672 = vpop.f32.mrf.mxu0
        %v673 = vpop.f32.mrf.mxu0
        %v674 = vadd.f32 %v382, %v673
        %v675 = vpop.f32.mrf.mxu0
        %676 = vmatprep.mubr.bf16.mxu0 0
        %677 = vmatmul.mubr.bf16.gmra.mxu0 %v523
        %v678 = vpop.f32.mrf.mxu0
        %v679 = vadd.f32 %v382, %v678
        %v680 = vpop.f32.mrf.mxu0
        %v681 = vpop.f32.mrf.mxu0
        %v682 = vadd.f32 %v382, %v681
        %v683 = vpop.f32.mrf.mxu0
        %684 = vmatprep.mubr.bf16.mxu0 0
        %685 = vmatmul.mubr.bf16.gmra.mxu0 %v526
        %v686 = vpop.f32.mrf.mxu0
        %v687 = vadd.f32 %v382, %v686
        %v688 = vpop.f32.mrf.mxu0
        %v689 = vpop.f32.mrf.mxu0
        %v690 = vadd.f32 %v382, %v689
        %v691 = vpop.f32.mrf.mxu0
        %692 = vdwg.mxu0
        %v693 = vmax.f32 %v567, 0.0
        %v694 = vmax.f32 %v570, 0.0
        %v695 = vmax.f32 %v575, 0.0
        %v696 = vmax.f32 %v578, 0.0
        %v697 = vmax.f32 %v583, 0.0
        %v698 = vmax.f32 %v586, 0.0
        %v699 = vmax.f32 %v591, 0.0
        %v700 = vmax.f32 %v594, 0.0
        %v701 = vmax.f32 %v599, 0.0
        %v702 = vmax.f32 %v602, 0.0
        %v703 = vmax.f32 %v607, 0.0
        %v704 = vmax.f32 %v610, 0.0
        %v705 = vmax.f32 %v615, 0.0
        %v706 = vmax.f32 %v618, 0.0
        %v707 = vmax.f32 %v623, 0.0
        %v708 = vmax.f32 %v626, 0.0
        %v709 = vmax.f32 %v631, 0.0
        %v710 = vmax.f32 %v634, 0.0
        %v711 = vmax.f32 %v639, 0.0
        %v712 = vmax.f32 %v642, 0.0
        %v713 = vmax.f32 %v647, 0.0
        %v714 = vmax.f32 %v650, 0.0
        %v715 = vmax.f32 %v655, 0.0
        %v716 = vmax.f32 %v658, 0.0
        %v717 = vmax.f32 %v663, 0.0
        %v718 = vmax.f32 %v666, 0.0
        %v719 = vmax.f32 %v671, 0.0
        %v720 = vmax.f32 %v674, 0.0
        %v721 = vmax.f32 %v679, 0.0
        %v722 = vmax.f32 %v682, 0.0
        %v723 = vmax.f32 %v687, 0.0
        %v724 = vmax.f32 %v690, 0.0
        %v725 = vpack.c.bf16 %v694, %v693
        %v726 = vpack.c.bf16 %v696, %v695
        %v727 = vpack.c.bf16 %v698, %v697
        %v728 = vpack.c.bf16 %v700, %v699
        %v729 = vpack.c.bf16 %v702, %v701
        %v730 = vpack.c.bf16 %v704, %v703
        %v731 = vpack.c.bf16 %v706, %v705
        %v732 = vpack.c.bf16 %v708, %v707
        %v733 = vpack.c.bf16 %v710, %v709
        %v734 = vpack.c.bf16 %v712, %v711
        %v735 = vpack.c.bf16 %v714, %v713
        %v736 = vpack.c.bf16 %v716, %v715
        %v737 = vpack.c.bf16 %v718, %v717
        %v738 = vpack.c.bf16 %v720, %v719
        %v739 = vpack.c.bf16 %v722, %v721
        %v740 = vpack.c.bf16 %v724, %v723
        %v741 = vld [vmem:[%s3] sm:$0xf]
        %v742 = vld [vmem:[%s3 + $0x4] sm:$0xf]
        %v743 = vld [vmem:[%s3 + $0x8] sm:$0xf]
        %v744 = vld [vmem:[%s3 + $0xc] sm:$0xf]
        %v745 = vld [vmem:[%s4] sm:$0x1]
        %v747 = vlaneseq
        %v748 = vshrl.u32 %v747, 7
        %v749 = vsub.s32 0, %v748
        %v750 = vrot.slane %v745, %v749
        %v756 = vunpack.c.l.b16 %v741
        %v757 = vunpack.c.l.b16 %v742
        %v758 = vunpack.c.l.b16 %v743
        %v759 = vunpack.c.l.b16 %v744
        %v760 = vpack.c.b16 %v757, %v756
        %v761 = vpack.c.b16 %v759, %v758
        %vm764 = vcmask 261120
        %v766 = vsel %vm764, %v725, 0
        %v769 = vsel %vm764, %v726, 0
        %v772 = vsel %vm764, %v727, 0
        %v775 = vsel %vm764, %v728, 0
        %v778 = vsel %vm764, %v729, 0
        %v781 = vsel %vm764, %v730, 0
        %v784 = vsel %vm764, %v731, 0
        %v787 = vsel %vm764, %v732, 0
        %v790 = vsel %vm764, %v733, 0
        %v793 = vsel %vm764, %v734, 0
        %v796 = vsel %vm764, %v735, 0
        %v799 = vsel %vm764, %v736, 0
        %v802 = vsel %vm764, %v737, 0
        %v805 = vsel %vm764, %v738, 0
        %v808 = vsel %vm764, %v739, 0
        %v811 = vsel %vm764, %v740, 0
        %813 = vmatprep.subr.bf16.mxu0 0
        %814 = vmatpush1.bf16.msra.mxu0 0
        %815 = vmatprep.subr.bf16.mxu0 0
        %816 = vmatpush1.bf16.msra.mxu0 0
        %817 = vmatprep.subr.bf16.mxu0 0
        %818 = vmatpush1.bf16.msra.mxu0 0
        %819 = vmatprep.subr.bf16.mxu0 0
        %820 = vmatpush1.bf16.msra.mxu0 0
        %821 = vmatprep.subr.bf16.mxu0 0
        %822 = vmatpush1.bf16.msra.mxu0 0
        %823 = vmatprep.subr.bf16.mxu0 0
        %824 = vmatpush1.bf16.msra.mxu0 0
        %825 = vmatprep.subr.bf16.mxu0 0
        %826 = vmatpush1.bf16.msra.mxu0 %v761
        %827 = vmatprep.subr.bf16.mxu0 0
        %828 = vmatpush1.bf16.msra.mxu0 %v760
        %829 = vmatprep.subr.bf16.mxu0 0
        %830 = vmatpush2.bf16.msra.mxu0 0
        %831 = vmatprep.subr.bf16.mxu0 0
        %832 = vmatpush2.bf16.msra.mxu0 0
        %833 = vmatprep.subr.bf16.mxu0 0
        %834 = vmatpush2.bf16.msra.mxu0 0
        %835 = vmatprep.subr.bf16.mxu0 0
        %836 = vmatpush2.bf16.msra.mxu0 0
        %837 = vmatprep.subr.bf16.mxu0 0
        %838 = vmatpush2.bf16.msra.mxu0 0
        %839 = vmatprep.subr.bf16.mxu0 0
        %840 = vmatpush2.bf16.msra.mxu0 0
        %841 = vmatprep.subr.bf16.mxu0 0
        %842 = vmatpush2.bf16.msra.mxu0 0
        %843 = vmatprep.subr.bf16.mxu0 0
        %844 = vmatpush2.bf16.msra.mxu0 0
        %845 = vmatprep.mubr.bf16.mxu0 0
        %846 = vmatmul.mubr.bf16.gmra.mxu0 %v766
        %v847 = vpop.f32.mrf.mxu0
        %v848 = vadd.f32 %v750, %v847
        %v849 = vpop.f32.mrf.mxu0
        %v850 = vpop.f32.mrf.mxu0
        %v851 = vadd.f32 %v750, %v850
        %v852 = vpop.f32.mrf.mxu0
        %853 = vmatprep.mubr.bf16.mxu0 0
        %854 = vmatmul.mubr.bf16.gmra.mxu0 %v769
        %v855 = vpop.f32.mrf.mxu0
        %v856 = vadd.f32 %v750, %v855
        %v857 = vpop.f32.mrf.mxu0
        %v858 = vpop.f32.mrf.mxu0
        %v859 = vadd.f32 %v750, %v858
        %v860 = vpop.f32.mrf.mxu0
        %861 = vmatprep.mubr.bf16.mxu0 0
        %862 = vmatmul.mubr.bf16.gmra.mxu0 %v772
        %v863 = vpop.f32.mrf.mxu0
        %v864 = vadd.f32 %v750, %v863
        %v865 = vpop.f32.mrf.mxu0
        %v866 = vpop.f32.mrf.mxu0
        %v867 = vadd.f32 %v750, %v866
        %v868 = vpop.f32.mrf.mxu0
        %869 = vmatprep.mubr.bf16.mxu0 0
        %870 = vmatmul.mubr.bf16.gmra.mxu0 %v775
        %v871 = vpop.f32.mrf.mxu0
        %v872 = vadd.f32 %v750, %v871
        %v873 = vpop.f32.mrf.mxu0
        %v874 = vpop.f32.mrf.mxu0
        %v875 = vadd.f32 %v750, %v874
        %v876 = vpop.f32.mrf.mxu0
        %877 = vmatprep.mubr.bf16.mxu0 0
        %878 = vmatmul.mubr.bf16.gmra.mxu0 %v778
        %v879 = vpop.f32.mrf.mxu0
        %v880 = vadd.f32 %v750, %v879
        %v881 = vpop.f32.mrf.mxu0
        %v882 = vpop.f32.mrf.mxu0
        %v883 = vadd.f32 %v750, %v882
        %v884 = vpop.f32.mrf.mxu0
        %885 = vmatprep.mubr.bf16.mxu0 0
        %886 = vmatmul.mubr.bf16.gmra.mxu0 %v781
        %v887 = vpop.f32.mrf.mxu0
        %v888 = vadd.f32 %v750, %v887
        %v889 = vpop.f32.mrf.mxu0
        %v890 = vpop.f32.mrf.mxu0
        %v891 = vadd.f32 %v750, %v890
        %v892 = vpop.f32.mrf.mxu0
        %893 = vmatprep.mubr.bf16.mxu0 0
        %894 = vmatmul.mubr.bf16.gmra.mxu0 %v784
        %v895 = vpop.f32.mrf.mxu0
        %v896 = vadd.f32 %v750, %v895
        %v897 = vpop.f32.mrf.mxu0
        %v898 = vpop.f32.mrf.mxu0
        %v899 = vadd.f32 %v750, %v898
        %v900 = vpop.f32.mrf.mxu0
        %901 = vmatprep.mubr.bf16.mxu0 0
        %902 = vmatmul.mubr.bf16.gmra.mxu0 %v787
        %v903 = vpop.f32.mrf.mxu0
        %v904 = vadd.f32 %v750, %v903
        %v905 = vpop.f32.mrf.mxu0
        %v906 = vpop.f32.mrf.mxu0
        %v907 = vadd.f32 %v750, %v906
        %v908 = vpop.f32.mrf.mxu0
        %909 = vmatprep.mubr.bf16.mxu0 0
        %910 = vmatmul.mubr.bf16.gmra.mxu0 %v790
        %v911 = vpop.f32.mrf.mxu0
        %v912 = vadd.f32 %v750, %v911
        %v913 = vpop.f32.mrf.mxu0
        %v914 = vpop.f32.mrf.mxu0
        %v915 = vadd.f32 %v750, %v914
        %v916 = vpop.f32.mrf.mxu0
        %917 = vmatprep.mubr.bf16.mxu0 0
        %918 = vmatmul.mubr.bf16.gmra.mxu0 %v793
        %v919 = vpop.f32.mrf.mxu0
        %v920 = vadd.f32 %v750, %v919
        %v921 = vpop.f32.mrf.mxu0
        %v922 = vpop.f32.mrf.mxu0
        %v923 = vadd.f32 %v750, %v922
        %v924 = vpop.f32.mrf.mxu0
        %925 = vmatprep.mubr.bf16.mxu0 0
        %926 = vmatmul.mubr.bf16.gmra.mxu0 %v796
        %v927 = vpop.f32.mrf.mxu0
        %v928 = vadd.f32 %v750, %v927
        %v929 = vpop.f32.mrf.mxu0
        %v930 = vpop.f32.mrf.mxu0
        %v931 = vadd.f32 %v750, %v930
        %v932 = vpop.f32.mrf.mxu0
        %933 = vmatprep.mubr.bf16.mxu0 0
        %934 = vmatmul.mubr.bf16.gmra.mxu0 %v799
        %v935 = vpop.f32.mrf.mxu0
        %v936 = vadd.f32 %v750, %v935
        %v937 = vpop.f32.mrf.mxu0
        %v938 = vpop.f32.mrf.mxu0
        %v939 = vadd.f32 %v750, %v938
        %v940 = vpop.f32.mrf.mxu0
        %941 = vmatprep.mubr.bf16.mxu0 0
        %942 = vmatmul.mubr.bf16.gmra.mxu0 %v802
        %v943 = vpop.f32.mrf.mxu0
        %v944 = vadd.f32 %v750, %v943
        %v945 = vpop.f32.mrf.mxu0
        %v946 = vpop.f32.mrf.mxu0
        %v947 = vadd.f32 %v750, %v946
        %v948 = vpop.f32.mrf.mxu0
        %949 = vmatprep.mubr.bf16.mxu0 0
        %950 = vmatmul.mubr.bf16.gmra.mxu0 %v805
        %v951 = vpop.f32.mrf.mxu0
        %v952 = vadd.f32 %v750, %v951
        %v953 = vpop.f32.mrf.mxu0
        %v954 = vpop.f32.mrf.mxu0
        %v955 = vadd.f32 %v750, %v954
        %v956 = vpop.f32.mrf.mxu0
        %957 = vmatprep.mubr.bf16.mxu0 0
        %958 = vmatmul.mubr.bf16.gmra.mxu0 %v808
        %v959 = vpop.f32.mrf.mxu0
        %v960 = vadd.f32 %v750, %v959
        %v961 = vpop.f32.mrf.mxu0
        %v962 = vpop.f32.mrf.mxu0
        %v963 = vadd.f32 %v750, %v962
        %v964 = vpop.f32.mrf.mxu0
        %965 = vmatprep.mubr.bf16.mxu0 0
        %966 = vmatmul.mubr.bf16.gmra.mxu0 %v811
        %v967 = vpop.f32.mrf.mxu0
        %v968 = vadd.f32 %v750, %v967
        %v969 = vpop.f32.mrf.mxu0
        %v970 = vpop.f32.mrf.mxu0
        %v971 = vadd.f32 %v750, %v970
        %v972 = vpop.f32.mrf.mxu0
        %973 = vdwg.mxu0
        %v974 = vxor.u32 %v848, 2147483648
        %v975 = vxor.u32 %v851, 2147483648
        %v976 = vxor.u32 %v856, 2147483648
        %v977 = vxor.u32 %v859, 2147483648
        %v978 = vxor.u32 %v864, 2147483648
        %v979 = vxor.u32 %v867, 2147483648
        %v980 = vxor.u32 %v872, 2147483648
        %v981 = vxor.u32 %v875, 2147483648
        %v982 = vxor.u32 %v880, 2147483648
        %v983 = vxor.u32 %v883, 2147483648
        %v984 = vxor.u32 %v888, 2147483648
        %v985 = vxor.u32 %v891, 2147483648
        %v986 = vxor.u32 %v896, 2147483648
        %v987 = vxor.u32 %v899, 2147483648
        %v988 = vxor.u32 %v904, 2147483648
        %v989 = vxor.u32 %v907, 2147483648
        %v990 = vxor.u32 %v912, 2147483648
        %v991 = vxor.u32 %v915, 2147483648
        %v992 = vxor.u32 %v920, 2147483648
        %v993 = vxor.u32 %v923, 2147483648
        %v994 = vxor.u32 %v928, 2147483648
        %v995 = vxor.u32 %v931, 2147483648
        %v996 = vxor.u32 %v936, 2147483648
        %v997 = vxor.u32 %v939, 2147483648
        %v998 = vxor.u32 %v944, 2147483648
        %v999 = vxor.u32 %v947, 2147483648
        %v1000 = vxor.u32 %v952, 2147483648
        %v1001 = vxor.u32 %v955, 2147483648
        %v1002 = vxor.u32 %v960, 2147483648
        %v1003 = vxor.u32 %v963, 2147483648
        %v1004 = vxor.u32 %v968, 2147483648
        %v1005 = vxor.u32 %v971, 2147483648
        %v1006 = vmul.f32 %v974, 1.442695
        %v1007 = vpow.pop %v1006
        %v1008 = vmul.f32 %v975, 1.442695
        %v1009 = vpow.pop %v1008
        %v1010 = vmul.f32 %v976, 1.442695
        %v1011 = vpow.pop %v1010
        %v1012 = vmul.f32 %v977, 1.442695
        %v1013 = vpow.pop %v1012
        %v1014 = vmul.f32 %v978, 1.442695
        %v1015 = vpow.pop %v1014
        %v1016 = vmul.f32 %v979, 1.442695
        %v1017 = vpow.pop %v1016
        %v1018 = vmul.f32 %v980, 1.442695
        %v1019 = vpow.pop %v1018
        %v1020 = vmul.f32 %v981, 1.442695
        %v1021 = vpow.pop %v1020
        %v1022 = vmul.f32 %v982, 1.442695
        %v1023 = vpow.pop %v1022
        %v1024 = vmul.f32 %v983, 1.442695
        %v1025 = vpow.pop %v1024
        %v1026 = vmul.f32 %v984, 1.442695
        %v1027 = vpow.pop %v1026
        %v1028 = vmul.f32 %v985, 1.442695
        %v1029 = vpow.pop %v1028
        %v1030 = vmul.f32 %v986, 1.442695
        %v1031 = vpow.pop %v1030
        %v1032 = vmul.f32 %v987, 1.442695
        %v1033 = vpow.pop %v1032
        %v1034 = vmul.f32 %v988, 1.442695
        %v1035 = vpow.pop %v1034
        %v1036 = vmul.f32 %v989, 1.442695
        %v1037 = vpow.pop %v1036
        %v1038 = vmul.f32 %v990, 1.442695
        %v1039 = vpow.pop %v1038
        %v1040 = vmul.f32 %v991, 1.442695
        %v1041 = vpow.pop %v1040
        %v1042 = vmul.f32 %v992, 1.442695
        %v1043 = vpow.pop %v1042
        %v1044 = vmul.f32 %v993, 1.442695
        %v1045 = vpow.pop %v1044
        %v1046 = vmul.f32 %v994, 1.442695
        %v1047 = vpow.pop %v1046
        %v1048 = vmul.f32 %v995, 1.442695
        %v1049 = vpow.pop %v1048
        %v1050 = vmul.f32 %v996, 1.442695
        %v1051 = vpow.pop %v1050
        %v1052 = vmul.f32 %v997, 1.442695
        %v1053 = vpow.pop %v1052
        %v1054 = vmul.f32 %v998, 1.442695
        %v1055 = vpow.pop %v1054
        %v1056 = vmul.f32 %v999, 1.442695
        %v1057 = vpow.pop %v1056
        %v1058 = vmul.f32 %v1000, 1.442695
        %v1059 = vpow.pop %v1058
        %v1060 = vmul.f32 %v1001, 1.442695
        %v1061 = vpow.pop %v1060
        %v1062 = vmul.f32 %v1002, 1.442695
        %v1063 = vpow.pop %v1062
        %v1064 = vmul.f32 %v1003, 1.442695
        %v1065 = vpow.pop %v1064
        %v1066 = vmul.f32 %v1004, 1.442695
        %v1067 = vpow.pop %v1066
        %v1068 = vmul.f32 %v1005, 1.442695
        %v1069 = vpow.pop %v1068
        %v1070 = vadd.f32 %v1007, 1.0
        %v1071 = vadd.f32 %v1009, 1.0
        %v1072 = vadd.f32 %v1011, 1.0
        %v1073 = vadd.f32 %v1013, 1.0
        %v1074 = vadd.f32 %v1015, 1.0
        %v1075 = vadd.f32 %v1017, 1.0
        %v1076 = vadd.f32 %v1019, 1.0
        %v1077 = vadd.f32 %v1021, 1.0
        %v1078 = vadd.f32 %v1023, 1.0
        %v1079 = vadd.f32 %v1025, 1.0
        %v1080 = vadd.f32 %v1027, 1.0
        %v1081 = vadd.f32 %v1029, 1.0
        %v1082 = vadd.f32 %v1031, 1.0
        %v1083 = vadd.f32 %v1033, 1.0
        %v1084 = vadd.f32 %v1035, 1.0
        %v1085 = vadd.f32 %v1037, 1.0
        %v1086 = vadd.f32 %v1039, 1.0
        %v1087 = vadd.f32 %v1041, 1.0
        %v1088 = vadd.f32 %v1043, 1.0
        %v1089 = vadd.f32 %v1045, 1.0
        %v1090 = vadd.f32 %v1047, 1.0
        %v1091 = vadd.f32 %v1049, 1.0
        %v1092 = vadd.f32 %v1051, 1.0
        %v1093 = vadd.f32 %v1053, 1.0
        %v1094 = vadd.f32 %v1055, 1.0
        %v1095 = vadd.f32 %v1057, 1.0
        %v1096 = vadd.f32 %v1059, 1.0
        %v1097 = vadd.f32 %v1061, 1.0
        %v1098 = vadd.f32 %v1063, 1.0
        %v1099 = vadd.f32 %v1065, 1.0
        %v1100 = vadd.f32 %v1067, 1.0
        %v1101 = vadd.f32 %v1069, 1.0
        %v1102 = vrcp.pop %v1070
        %v1103 = vmul.f32 1.0, %v1102
        %v1104 = vrcp.pop %v1071
        %v1105 = vmul.f32 1.0, %v1104
        %v1106 = vrcp.pop %v1072
        %v1107 = vmul.f32 1.0, %v1106
        %v1108 = vrcp.pop %v1073
        %v1109 = vmul.f32 1.0, %v1108
        %v1110 = vrcp.pop %v1074
        %v1111 = vmul.f32 1.0, %v1110
        %v1112 = vrcp.pop %v1075
        %v1113 = vmul.f32 1.0, %v1112
        %v1114 = vrcp.pop %v1076
        %v1115 = vmul.f32 1.0, %v1114
        %v1116 = vrcp.pop %v1077
        %v1117 = vmul.f32 1.0, %v1116
        %v1118 = vrcp.pop %v1078
        %v1119 = vmul.f32 1.0, %v1118
        %v1120 = vrcp.pop %v1079
        %v1121 = vmul.f32 1.0, %v1120
        %v1122 = vrcp.pop %v1080
        %v1123 = vmul.f32 1.0, %v1122
        %v1124 = vrcp.pop %v1081
        %v1125 = vmul.f32 1.0, %v1124
        %v1126 = vrcp.pop %v1082
        %v1127 = vmul.f32 1.0, %v1126
        %v1128 = vrcp.pop %v1083
        %v1129 = vmul.f32 1.0, %v1128
        %v1130 = vrcp.pop %v1084
        %v1131 = vmul.f32 1.0, %v1130
        %v1132 = vrcp.pop %v1085
        %v1133 = vmul.f32 1.0, %v1132
        %v1134 = vrcp.pop %v1086
        %v1135 = vmul.f32 1.0, %v1134
        %v1136 = vrcp.pop %v1087
        %v1137 = vmul.f32 1.0, %v1136
        %v1138 = vrcp.pop %v1088
        %v1139 = vmul.f32 1.0, %v1138
        %v1140 = vrcp.pop %v1089
        %v1141 = vmul.f32 1.0, %v1140
        %v1142 = vrcp.pop %v1090
        %v1143 = vmul.f32 1.0, %v1142
        %v1144 = vrcp.pop %v1091
        %v1145 = vmul.f32 1.0, %v1144
        %v1146 = vrcp.pop %v1092
        %v1147 = vmul.f32 1.0, %v1146
        %v1148 = vrcp.pop %v1093
        %v1149 = vmul.f32 1.0, %v1148
        %v1150 = vrcp.pop %v1094
        %v1151 = vmul.f32 1.0, %v1150
        %v1152 = vrcp.pop %v1095
        %v1153 = vmul.f32 1.0, %v1152
        %v1154 = vrcp.pop %v1096
        %v1155 = vmul.f32 1.0, %v1154
        %v1156 = vrcp.pop %v1097
        %v1157 = vmul.f32 1.0, %v1156
        %v1158 = vrcp.pop %v1098
        %v1159 = vmul.f32 1.0, %v1158
        %v1160 = vrcp.pop %v1099
        %v1161 = vmul.f32 1.0, %v1160
        %v1162 = vrcp.pop %v1100
        %v1163 = vmul.f32 1.0, %v1162
        %v1164 = vrcp.pop %v1101
        %v1165 = vmul.f32 1.0, %v1164
        %v1166 = vmul.f32 %v1103, %v1103
        %v1167 = vmul.f32 %v1105, %v1105
        %v1168 = vmul.f32 %v1107, %v1107
        %v1169 = vmul.f32 %v1109, %v1109
        %v1170 = vmul.f32 %v1111, %v1111
        %v1171 = vmul.f32 %v1113, %v1113
        %v1172 = vmul.f32 %v1115, %v1115
        %v1173 = vmul.f32 %v1117, %v1117
        %v1174 = vmul.f32 %v1119, %v1119
        %v1175 = vmul.f32 %v1121, %v1121
        %v1176 = vmul.f32 %v1123, %v1123
        %v1177 = vmul.f32 %v1125, %v1125
        %v1178 = vmul.f32 %v1127, %v1127
        %v1179 = vmul.f32 %v1129, %v1129
        %v1180 = vmul.f32 %v1131, %v1131
        %v1181 = vmul.f32 %v1133, %v1133
        %v1182 = vmul.f32 %v1135, %v1135
        %v1183 = vmul.f32 %v1137, %v1137
        %v1184 = vmul.f32 %v1139, %v1139
        %v1185 = vmul.f32 %v1141, %v1141
        %v1186 = vmul.f32 %v1143, %v1143
        %v1187 = vmul.f32 %v1145, %v1145
        %v1188 = vmul.f32 %v1147, %v1147
        %v1189 = vmul.f32 %v1149, %v1149
        %v1190 = vmul.f32 %v1151, %v1151
        %v1191 = vmul.f32 %v1153, %v1153
        %v1192 = vmul.f32 %v1155, %v1155
        %v1193 = vmul.f32 %v1157, %v1157
        %v1194 = vmul.f32 %v1159, %v1159
        %v1195 = vmul.f32 %v1161, %v1161
        %v1196 = vmul.f32 %v1163, %v1163
        %v1197 = vmul.f32 %v1165, %v1165
        %vm1198 = vcmask 523264
        %v1199 = vsel %vm1198, %v1166, 0.0
        %1200 = vadd.xlane.f32.xlu0 %v1199
        %v1201 = vpop.xlane.xlu0 %1200
        %v1202 = vsel %vm1198, %v1167, 0.0
        %1203 = vadd.xlane.f32.xlu0 %v1202
        %v1204 = vpop.xlane.xlu0 %1203
        %v1205 = vsel %vm1198, %v1168, 0.0
        %1206 = vadd.xlane.f32.xlu0 %v1205
        %v1207 = vpop.xlane.xlu0 %1206
        %v1208 = vsel %vm1198, %v1169, 0.0
        %1209 = vadd.xlane.f32.xlu0 %v1208
        %v1210 = vpop.xlane.xlu0 %1209
        %v1211 = vsel %vm1198, %v1170, 0.0
        %1212 = vadd.xlane.f32.xlu0 %v1211
        %v1213 = vpop.xlane.xlu0 %1212
        %v1214 = vsel %vm1198, %v1171, 0.0
        %1215 = vadd.xlane.f32.xlu0 %v1214
        %v1216 = vpop.xlane.xlu0 %1215
        %v1217 = vsel %vm1198, %v1172, 0.0
        %1218 = vadd.xlane.f32.xlu0 %v1217
        %v1219 = vpop.xlane.xlu0 %1218
        %v1220 = vsel %vm1198, %v1173, 0.0
        %1221 = vadd.xlane.f32.xlu0 %v1220
        %v1222 = vpop.xlane.xlu0 %1221
        %v1223 = vsel %vm1198, %v1174, 0.0
        %1224 = vadd.xlane.f32.xlu0 %v1223
        %v1225 = vpop.xlane.xlu0 %1224
        %v1226 = vsel %vm1198, %v1175, 0.0
        %1227 = vadd.xlane.f32.xlu0 %v1226
        %v1228 = vpop.xlane.xlu0 %1227
        %v1229 = vsel %vm1198, %v1176, 0.0
        %1230 = vadd.xlane.f32.xlu0 %v1229
        %v1231 = vpop.xlane.xlu0 %1230
        %v1232 = vsel %vm1198, %v1177, 0.0
        %1233 = vadd.xlane.f32.xlu0 %v1232
        %v1234 = vpop.xlane.xlu0 %1233
        %v1235 = vsel %vm1198, %v1178, 0.0
        %1236 = vadd.xlane.f32.xlu0 %v1235
        %v1237 = vpop.xlane.xlu0 %1236
        %v1238 = vsel %vm1198, %v1179, 0.0
        %1239 = vadd.xlane.f32.xlu0 %v1238
        %v1240 = vpop.xlane.xlu0 %1239
        %v1241 = vsel %vm1198, %v1180, 0.0
        %1242 = vadd.xlane.f32.xlu0 %v1241
        %v1243 = vpop.xlane.xlu0 %1242
        %v1244 = vsel %vm1198, %v1181, 0.0
        %1245 = vadd.xlane.f32.xlu0 %v1244
        %v1246 = vpop.xlane.xlu0 %1245
        %v1247 = vsel %vm1198, %v1182, 0.0
        %1248 = vadd.xlane.f32.xlu0 %v1247
        %v1249 = vpop.xlane.xlu0 %1248
        %v1250 = vsel %vm1198, %v1183, 0.0
        %1251 = vadd.xlane.f32.xlu0 %v1250
        %v1252 = vpop.xlane.xlu0 %1251
        %v1253 = vsel %vm1198, %v1184, 0.0
        %1254 = vadd.xlane.f32.xlu0 %v1253
        %v1255 = vpop.xlane.xlu0 %1254
        %v1256 = vsel %vm1198, %v1185, 0.0
        %1257 = vadd.xlane.f32.xlu0 %v1256
        %v1258 = vpop.xlane.xlu0 %1257
        %v1259 = vsel %vm1198, %v1186, 0.0
        %1260 = vadd.xlane.f32.xlu0 %v1259
        %v1261 = vpop.xlane.xlu0 %1260
        %v1262 = vsel %vm1198, %v1187, 0.0
        %1263 = vadd.xlane.f32.xlu0 %v1262
        %v1264 = vpop.xlane.xlu0 %1263
        %v1265 = vsel %vm1198, %v1188, 0.0
        %1266 = vadd.xlane.f32.xlu0 %v1265
        %v1267 = vpop.xlane.xlu0 %1266
        %v1268 = vsel %vm1198, %v1189, 0.0
        %1269 = vadd.xlane.f32.xlu0 %v1268
        %v1270 = vpop.xlane.xlu0 %1269
        %v1271 = vsel %vm1198, %v1190, 0.0
        %1272 = vadd.xlane.f32.xlu0 %v1271
        %v1273 = vpop.xlane.xlu0 %1272
        %v1274 = vsel %vm1198, %v1191, 0.0
        %1275 = vadd.xlane.f32.xlu0 %v1274
        %v1276 = vpop.xlane.xlu0 %1275
        %v1277 = vsel %vm1198, %v1192, 0.0
        %1278 = vadd.xlane.f32.xlu0 %v1277
        %v1279 = vpop.xlane.xlu0 %1278
        %v1280 = vsel %vm1198, %v1193, 0.0
        %1281 = vadd.xlane.f32.xlu0 %v1280
        %v1282 = vpop.xlane.xlu0 %1281
        %v1283 = vsel %vm1198, %v1194, 0.0
        %1284 = vadd.xlane.f32.xlu0 %v1283
        %v1285 = vpop.xlane.xlu0 %1284
        %v1286 = vsel %vm1198, %v1195, 0.0
        %1287 = vadd.xlane.f32.xlu0 %v1286
        %v1288 = vpop.xlane.xlu0 %1287
        %v1289 = vsel %vm1198, %v1196, 0.0
        %1290 = vadd.xlane.f32.xlu0 %v1289
        %v1291 = vpop.xlane.xlu0 %1290
        %v1292 = vsel %vm1198, %v1197, 0.0
        %1293 = vadd.xlane.f32.xlu0 %v1292
        %v1294 = vpop.xlane.xlu0 %1293
        %v1295 = vpack.c.bf16 %v1105, %v1103
        %v1296 = vpack.c.bf16 %v1109, %v1107
        %v1297 = vpack.c.bf16 %v1113, %v1111
        %v1298 = vpack.c.bf16 %v1117, %v1115
        %v1299 = vpack.c.bf16 %v1121, %v1119
        %v1300 = vpack.c.bf16 %v1125, %v1123
        %v1301 = vpack.c.bf16 %v1129, %v1127
        %v1302 = vpack.c.bf16 %v1133, %v1131
        %v1303 = vpack.c.bf16 %v1137, %v1135
        %v1304 = vpack.c.bf16 %v1141, %v1139
        %v1305 = vpack.c.bf16 %v1145, %v1143
        %v1306 = vpack.c.bf16 %v1149, %v1147
        %v1307 = vpack.c.bf16 %v1153, %v1151
        %v1308 = vpack.c.bf16 %v1157, %v1155
        %v1309 = vpack.c.bf16 %v1161, %v1159
        %v1310 = vpack.c.bf16 %v1165, %v1163
        %v1311 = vld [vmem:[%s5] sm:$0xf]
        %v1312 = vld [vmem:[%s5 + $0x4] sm:$0xf]
        %v1313 = vld [vmem:[%s5 + $0x8] sm:$0xf]
        %v1314 = vld [vmem:[%s5 + $0xc] sm:$0xf]
        %v1315 = vld [vmem:[%s5 + $0x10] sm:$0xf]
        %v1316 = vld [vmem:[%s5 + $0x14] sm:$0xf]
        %v1317 = vld [vmem:[%s5 + $0x18] sm:$0xf]
        %v1318 = vld [vmem:[%s5 + $0x1c] sm:$0xf]
        %v1327 = vunpack.c.l.b16 %v1311
        %v1328 = vunpack.c.l.b16 %v1312
        %v1329 = vunpack.c.l.b16 %v1313
        %v1330 = vunpack.c.l.b16 %v1314
        %v1331 = vunpack.c.l.b16 %v1315
        %v1332 = vunpack.c.l.b16 %v1316
        %v1333 = vunpack.c.l.b16 %v1317
        %v1334 = vunpack.c.l.b16 %v1318
        %v1335 = vpack.c.b16 %v1328, %v1327
        %v1336 = vpack.c.b16 %v1330, %v1329
        %v1337 = vpack.c.b16 %v1332, %v1331
        %v1338 = vpack.c.b16 %v1334, %v1333
        %v1344 = vsel %vm1198, %v1295, 0
        %v1347 = vsel %vm1198, %v1296, 0
        %v1350 = vsel %vm1198, %v1297, 0
        %v1353 = vsel %vm1198, %v1298, 0
        %v1356 = vsel %vm1198, %v1299, 0
        %v1359 = vsel %vm1198, %v1300, 0
        %v1362 = vsel %vm1198, %v1301, 0
        %v1365 = vsel %vm1198, %v1302, 0
        %v1368 = vsel %vm1198, %v1303, 0
        %v1371 = vsel %vm1198, %v1304, 0
        %v1374 = vsel %vm1198, %v1305, 0
        %v1377 = vsel %vm1198, %v1306, 0
        %v1380 = vsel %vm1198, %v1307, 0
        %v1383 = vsel %vm1198, %v1308, 0
        %v1386 = vsel %vm1198, %v1309, 0
        %v1389 = vsel %vm1198, %v1310, 0
        %1391 = vmatprep.subr.bf16.mxu0 0
        %1392 = vmatpush1.bf16.msra.mxu0 0
        %1393 = vmatprep.subr.bf16.mxu0 0
        %1394 = vmatpush1.bf16.msra.mxu0 0
        %1395 = vmatprep.subr.bf16.mxu0 0
        %1396 = vmatpush1.bf16.msra.mxu0 0
        %1397 = vmatprep.subr.bf16.mxu0 0
        %1398 = vmatpush1.bf16.msra.mxu0 0
        %1399 = vmatprep.subr.bf16.mxu0 0
        %1400 = vmatpush1.bf16.msra.mxu0 %v1338
        %1401 = vmatprep.subr.bf16.mxu0 0
        %1402 = vmatpush1.bf16.msra.mxu0 %v1337
        %1403 = vmatprep.subr.bf16.mxu0 0
        %1404 = vmatpush1.bf16.msra.mxu0 %v1336
        %1405 = vmatprep.subr.bf16.mxu0 0
        %1406 = vmatpush1.bf16.msra.mxu0 %v1335
        %1407 = vmatprep.subr.bf16.mxu0 0
        %1408 = vmatpush2.bf16.msra.mxu0 0
        %1409 = vmatprep.subr.bf16.mxu0 0
        %1410 = vmatpush2.bf16.msra.mxu0 0
        %1411 = vmatprep.subr.bf16.mxu0 0
        %1412 = vmatpush2.bf16.msra.mxu0 0
        %1413 = vmatprep.subr.bf16.mxu0 0
        %1414 = vmatpush2.bf16.msra.mxu0 0
        %1415 = vmatprep.subr.bf16.mxu0 0
        %1416 = vmatpush2.bf16.msra.mxu0 0
        %1417 = vmatprep.subr.bf16.mxu0 0
        %1418 = vmatpush2.bf16.msra.mxu0 0
        %1419 = vmatprep.subr.bf16.mxu0 0
        %1420 = vmatpush2.bf16.msra.mxu0 0
        %1421 = vmatprep.subr.bf16.mxu0 0
        %1422 = vmatpush2.bf16.msra.mxu0 0
        %1423 = vmatprep.mubr.bf16.mxu0 0
        %1424 = vmatmul.mubr.bf16.gmra.mxu0 %v1344
        %v1425 = vpop.f32.mrf.mxu0
        %v1426 = vadd.f32 0.0, %v1425
        %v1427 = vpop.f32.mrf.mxu0
        %v1428 = vpop.f32.mrf.mxu0
        %v1429 = vadd.f32 0.0, %v1428
        %v1430 = vpop.f32.mrf.mxu0
        %1431 = vmatprep.mubr.bf16.mxu0 0
        %1432 = vmatmul.mubr.bf16.gmra.mxu0 %v1347
        %v1433 = vpop.f32.mrf.mxu0
        %v1434 = vadd.f32 0.0, %v1433
        %v1435 = vpop.f32.mrf.mxu0
        %v1436 = vpop.f32.mrf.mxu0
        %v1437 = vadd.f32 0.0, %v1436
        %v1438 = vpop.f32.mrf.mxu0
        %1439 = vmatprep.mubr.bf16.mxu0 0
        %1440 = vmatmul.mubr.bf16.gmra.mxu0 %v1350
        %v1441 = vpop.f32.mrf.mxu0
        %v1442 = vadd.f32 0.0, %v1441
        %v1443 = vpop.f32.mrf.mxu0
        %v1444 = vpop.f32.mrf.mxu0
        %v1445 = vadd.f32 0.0, %v1444
        %v1446 = vpop.f32.mrf.mxu0
        %1447 = vmatprep.mubr.bf16.mxu0 0
        %1448 = vmatmul.mubr.bf16.gmra.mxu0 %v1353
        %v1449 = vpop.f32.mrf.mxu0
        %v1450 = vadd.f32 0.0, %v1449
        %v1451 = vpop.f32.mrf.mxu0
        %v1452 = vpop.f32.mrf.mxu0
        %v1453 = vadd.f32 0.0, %v1452
        %v1454 = vpop.f32.mrf.mxu0
        %1455 = vmatprep.mubr.bf16.mxu0 0
        %1456 = vmatmul.mubr.bf16.gmra.mxu0 %v1356
        %v1457 = vpop.f32.mrf.mxu0
        %v1458 = vadd.f32 0.0, %v1457
        %v1459 = vpop.f32.mrf.mxu0
        %v1460 = vpop.f32.mrf.mxu0
        %v1461 = vadd.f32 0.0, %v1460
        %v1462 = vpop.f32.mrf.mxu0
        %1463 = vmatprep.mubr.bf16.mxu0 0
        %1464 = vmatmul.mubr.bf16.gmra.mxu0 %v1359
        %v1465 = vpop.f32.mrf.mxu0
        %v1466 = vadd.f32 0.0, %v1465
        %v1467 = vpop.f32.mrf.mxu0
        %v1468 = vpop.f32.mrf.mxu0
        %v1469 = vadd.f32 0.0, %v1468
        %v1470 = vpop.f32.mrf.mxu0
        %1471 = vmatprep.mubr.bf16.mxu0 0
        %1472 = vmatmul.mubr.bf16.gmra.mxu0 %v1362
        %v1473 = vpop.f32.mrf.mxu0
        %v1474 = vadd.f32 0.0, %v1473
        %v1475 = vpop.f32.mrf.mxu0
        %v1476 = vpop.f32.mrf.mxu0
        %v1477 = vadd.f32 0.0, %v1476
        %v1478 = vpop.f32.mrf.mxu0
        %1479 = vmatprep.mubr.bf16.mxu0 0
        %1480 = vmatmul.mubr.bf16.gmra.mxu0 %v1365
        %v1481 = vpop.f32.mrf.mxu0
        %v1482 = vadd.f32 0.0, %v1481
        %v1483 = vpop.f32.mrf.mxu0
        %v1484 = vpop.f32.mrf.mxu0
        %v1485 = vadd.f32 0.0, %v1484
        %v1486 = vpop.f32.mrf.mxu0
        %1487 = vmatprep.mubr.bf16.mxu0 0
        %1488 = vmatmul.mubr.bf16.gmra.mxu0 %v1368
        %v1489 = vpop.f32.mrf.mxu0
        %v1490 = vadd.f32 0.0, %v1489
        %v1491 = vpop.f32.mrf.mxu0
        %v1492 = vpop.f32.mrf.mxu0
        %v1493 = vadd.f32 0.0, %v1492
        %v1494 = vpop.f32.mrf.mxu0
        %1495 = vmatprep.mubr.bf16.mxu0 0
        %1496 = vmatmul.mubr.bf16.gmra.mxu0 %v1371
        %v1497 = vpop.f32.mrf.mxu0
        %v1498 = vadd.f32 0.0, %v1497
        %v1499 = vpop.f32.mrf.mxu0
        %v1500 = vpop.f32.mrf.mxu0
        %v1501 = vadd.f32 0.0, %v1500
        %v1502 = vpop.f32.mrf.mxu0
        %1503 = vmatprep.mubr.bf16.mxu0 0
        %1504 = vmatmul.mubr.bf16.gmra.mxu0 %v1374
        %v1505 = vpop.f32.mrf.mxu0
        %v1506 = vadd.f32 0.0, %v1505
        %v1507 = vpop.f32.mrf.mxu0
        %v1508 = vpop.f32.mrf.mxu0
        %v1509 = vadd.f32 0.0, %v1508
        %v1510 = vpop.f32.mrf.mxu0
        %1511 = vmatprep.mubr.bf16.mxu0 0
        %1512 = vmatmul.mubr.bf16.gmra.mxu0 %v1377
        %v1513 = vpop.f32.mrf.mxu0
        %v1514 = vadd.f32 0.0, %v1513
        %v1515 = vpop.f32.mrf.mxu0
        %v1516 = vpop.f32.mrf.mxu0
        %v1517 = vadd.f32 0.0, %v1516
        %v1518 = vpop.f32.mrf.mxu0
        %1519 = vmatprep.mubr.bf16.mxu0 0
        %1520 = vmatmul.mubr.bf16.gmra.mxu0 %v1380
        %v1521 = vpop.f32.mrf.mxu0
        %v1522 = vadd.f32 0.0, %v1521
        %v1523 = vpop.f32.mrf.mxu0
        %v1524 = vpop.f32.mrf.mxu0
        %v1525 = vadd.f32 0.0, %v1524
        %v1526 = vpop.f32.mrf.mxu0
        %1527 = vmatprep.mubr.bf16.mxu0 0
        %1528 = vmatmul.mubr.bf16.gmra.mxu0 %v1383
        %v1529 = vpop.f32.mrf.mxu0
        %v1530 = vadd.f32 0.0, %v1529
        %v1531 = vpop.f32.mrf.mxu0
        %v1532 = vpop.f32.mrf.mxu0
        %v1533 = vadd.f32 0.0, %v1532
        %v1534 = vpop.f32.mrf.mxu0
        %1535 = vmatprep.mubr.bf16.mxu0 0
        %1536 = vmatmul.mubr.bf16.gmra.mxu0 %v1386
        %v1537 = vpop.f32.mrf.mxu0
        %v1538 = vadd.f32 0.0, %v1537
        %v1539 = vpop.f32.mrf.mxu0
        %v1540 = vpop.f32.mrf.mxu0
        %v1541 = vadd.f32 0.0, %v1540
        %v1542 = vpop.f32.mrf.mxu0
        %1543 = vmatprep.mubr.bf16.mxu0 0
        %1544 = vmatmul.mubr.bf16.gmra.mxu0 %v1389
        %v1545 = vpop.f32.mrf.mxu0
        %v1546 = vadd.f32 0.0, %v1545
        %v1547 = vpop.f32.mrf.mxu0
        %v1548 = vpop.f32.mrf.mxu0
        %v1549 = vadd.f32 0.0, %v1548
        %v1550 = vpop.f32.mrf.mxu0
        %1551 = vdwg.mxu0
        %v1552 = vmul.f32 %v1426, 2.0
        %v1553 = vmul.f32 %v1429, 2.0
        %v1554 = vmul.f32 %v1434, 2.0
        %v1555 = vmul.f32 %v1437, 2.0
        %v1556 = vmul.f32 %v1442, 2.0
        %v1557 = vmul.f32 %v1445, 2.0
        %v1558 = vmul.f32 %v1450, 2.0
        %v1559 = vmul.f32 %v1453, 2.0
        %v1560 = vmul.f32 %v1458, 2.0
        %v1561 = vmul.f32 %v1461, 2.0
        %v1562 = vmul.f32 %v1466, 2.0
        %v1563 = vmul.f32 %v1469, 2.0
        %v1564 = vmul.f32 %v1474, 2.0
        %v1565 = vmul.f32 %v1477, 2.0
        %v1566 = vmul.f32 %v1482, 2.0
        %v1567 = vmul.f32 %v1485, 2.0
        %v1568 = vmul.f32 %v1490, 2.0
        %v1569 = vmul.f32 %v1493, 2.0
        %v1570 = vmul.f32 %v1498, 2.0
        %v1571 = vmul.f32 %v1501, 2.0
        %v1572 = vmul.f32 %v1506, 2.0
        %v1573 = vmul.f32 %v1509, 2.0
        %v1574 = vmul.f32 %v1514, 2.0
        %v1575 = vmul.f32 %v1517, 2.0
        %v1576 = vmul.f32 %v1522, 2.0
        %v1577 = vmul.f32 %v1525, 2.0
        %v1578 = vmul.f32 %v1530, 2.0
        %v1579 = vmul.f32 %v1533, 2.0
        %v1580 = vmul.f32 %v1538, 2.0
        %v1581 = vmul.f32 %v1541, 2.0
        %v1582 = vmul.f32 %v1546, 2.0
        %v1583 = vmul.f32 %v1549, 2.0
        %v1584 = vsub.f32 %v1201, %v1552
        %v1585 = vsub.f32 %v1204, %v1553
        %v1586 = vsub.f32 %v1207, %v1554
        %v1587 = vsub.f32 %v1210, %v1555
        %v1588 = vsub.f32 %v1213, %v1556
        %v1589 = vsub.f32 %v1216, %v1557
        %v1590 = vsub.f32 %v1219, %v1558
        %v1591 = vsub.f32 %v1222, %v1559
        %v1592 = vsub.f32 %v1225, %v1560
        %v1593 = vsub.f32 %v1228, %v1561
        %v1594 = vsub.f32 %v1231, %v1562
        %v1595 = vsub.f32 %v1234, %v1563
        %v1596 = vsub.f32 %v1237, %v1564
        %v1597 = vsub.f32 %v1240, %v1565
        %v1598 = vsub.f32 %v1243, %v1566
        %v1599 = vsub.f32 %v1246, %v1567
        %v1600 = vsub.f32 %v1249, %v1568
        %v1601 = vsub.f32 %v1252, %v1569
        %v1602 = vsub.f32 %v1255, %v1570
        %v1603 = vsub.f32 %v1258, %v1571
        %v1604 = vsub.f32 %v1261, %v1572
        %v1605 = vsub.f32 %v1264, %v1573
        %v1606 = vsub.f32 %v1267, %v1574
        %v1607 = vsub.f32 %v1270, %v1575
        %v1608 = vsub.f32 %v1273, %v1576
        %v1609 = vsub.f32 %v1276, %v1577
        %v1610 = vsub.f32 %v1279, %v1578
        %v1611 = vsub.f32 %v1282, %v1579
        %v1612 = vsub.f32 %v1285, %v1580
        %v1613 = vsub.f32 %v1288, %v1581
        %v1614 = vsub.f32 %v1291, %v1582
        %v1615 = vsub.f32 %v1294, %v1583
        %v1616 = vld [vmem:[%s6] sm:$0x1]
        %v1618 = vlaneseq
        %v1619 = vshrl.u32 %v1618, 7
        %v1620 = vsub.s32 0, %v1619
        %v1621 = vrot.slane %v1616, %v1620
        %v1623 = vadd.f32 %v1584, %v1621
        %v1624 = vadd.f32 %v1585, %v1621
        %v1625 = vadd.f32 %v1586, %v1621
        %v1626 = vadd.f32 %v1587, %v1621
        %v1627 = vadd.f32 %v1588, %v1621
        %v1628 = vadd.f32 %v1589, %v1621
        %v1629 = vadd.f32 %v1590, %v1621
        %v1630 = vadd.f32 %v1591, %v1621
        %v1631 = vadd.f32 %v1592, %v1621
        %v1632 = vadd.f32 %v1593, %v1621
        %v1633 = vadd.f32 %v1594, %v1621
        %v1634 = vadd.f32 %v1595, %v1621
        %v1635 = vadd.f32 %v1596, %v1621
        %v1636 = vadd.f32 %v1597, %v1621
        %v1637 = vadd.f32 %v1598, %v1621
        %v1638 = vadd.f32 %v1599, %v1621
        %v1639 = vadd.f32 %v1600, %v1621
        %v1640 = vadd.f32 %v1601, %v1621
        %v1641 = vadd.f32 %v1602, %v1621
        %v1642 = vadd.f32 %v1603, %v1621
        %v1643 = vadd.f32 %v1604, %v1621
        %v1644 = vadd.f32 %v1605, %v1621
        %v1645 = vadd.f32 %v1606, %v1621
        %v1646 = vadd.f32 %v1607, %v1621
        %v1647 = vadd.f32 %v1608, %v1621
        %v1648 = vadd.f32 %v1609, %v1621
        %v1649 = vadd.f32 %v1610, %v1621
        %v1650 = vadd.f32 %v1611, %v1621
        %v1651 = vadd.f32 %v1612, %v1621
        %v1652 = vadd.f32 %v1613, %v1621
        %v1653 = vadd.f32 %v1614, %v1621
        %v1654 = vadd.f32 %v1615, %v1621
        %v1655 = vmax.f32 %v1623, 0.0
        %v1656 = vmax.f32 %v1624, 0.0
        %v1657 = vmax.f32 %v1625, 0.0
        %v1658 = vmax.f32 %v1626, 0.0
        %v1659 = vmax.f32 %v1627, 0.0
        %v1660 = vmax.f32 %v1628, 0.0
        %v1661 = vmax.f32 %v1629, 0.0
        %v1662 = vmax.f32 %v1630, 0.0
        %v1663 = vmax.f32 %v1631, 0.0
        %v1664 = vmax.f32 %v1632, 0.0
        %v1665 = vmax.f32 %v1633, 0.0
        %v1666 = vmax.f32 %v1634, 0.0
        %v1667 = vmax.f32 %v1635, 0.0
        %v1668 = vmax.f32 %v1636, 0.0
        %v1669 = vmax.f32 %v1637, 0.0
        %v1670 = vmax.f32 %v1638, 0.0
        %v1671 = vmax.f32 %v1639, 0.0
        %v1672 = vmax.f32 %v1640, 0.0
        %v1673 = vmax.f32 %v1641, 0.0
        %v1674 = vmax.f32 %v1642, 0.0
        %v1675 = vmax.f32 %v1643, 0.0
        %v1676 = vmax.f32 %v1644, 0.0
        %v1677 = vmax.f32 %v1645, 0.0
        %v1678 = vmax.f32 %v1646, 0.0
        %v1679 = vmax.f32 %v1647, 0.0
        %v1680 = vmax.f32 %v1648, 0.0
        %v1681 = vmax.f32 %v1649, 0.0
        %v1682 = vmax.f32 %v1650, 0.0
        %v1683 = vmax.f32 %v1651, 0.0
        %v1684 = vmax.f32 %v1652, 0.0
        %v1685 = vmax.f32 %v1653, 0.0
        %v1686 = vmax.f32 %v1654, 0.0
        %v1687 = vld [vmem:[#allocation2] sm:$0x1]
        %v1688 = vmin.f32 %v1655, %v1659
        %v1689 = vmin.f32 %v1656, %v1660
        %v1690 = vmin.f32 %v1657, %v1661
        %v1691 = vmin.f32 %v1658, %v1662
        %v1692 = vmin.f32 %v1688, %v1663
        %v1693 = vmin.f32 %v1689, %v1664
        %v1694 = vmin.f32 %v1690, %v1665
        %v1695 = vmin.f32 %v1691, %v1666
        %v1696 = vmin.f32 %v1692, %v1667
        %v1697 = vmin.f32 %v1693, %v1668
        %v1698 = vmin.f32 %v1694, %v1669
        %v1699 = vmin.f32 %v1695, %v1670
        %v1700 = vmin.f32 %v1696, %v1671
        %v1701 = vmin.f32 %v1697, %v1672
        %v1702 = vmin.f32 %v1698, %v1673
        %v1703 = vmin.f32 %v1699, %v1674
        %v1704 = vmin.f32 %v1700, %v1675
        %v1705 = vmin.f32 %v1701, %v1676
        %v1706 = vmin.f32 %v1702, %v1677
        %v1707 = vmin.f32 %v1703, %v1678
        %v1708 = vmin.f32 %v1704, %v1679
        %v1709 = vmin.f32 %v1705, %v1680
        %v1710 = vmin.f32 %v1706, %v1681
        %v1711 = vmin.f32 %v1707, %v1682
        %v1712 = vmin.f32 %v1708, %v1683
        %v1713 = vmin.f32 %v1709, %v1684
        %v1714 = vmin.f32 %v1710, %v1685
        %v1715 = vmin.f32 %v1711, %v1686
        %v1716 = vmin.f32 %v1712, %v1713
        %v1717 = vmin.f32 %v1714, %v1715
        %v1718 = vmin.f32 %v1716, %v1717
        %v1719 = vrot.slane %v1718, 4
        %v1720 = vmin.f32 %v1718, %v1719
        %v1721 = vrot.slane %v1720, 2
        %v1722 = vmin.f32 %v1720, %v1721
        %v1723 = vrot.slane %v1722, 1
        %v1724 = vmin.f32 %v1722, %v1723
        %v1725 = vmin.f32 %v1687, %v1724
        %1726 = vst [vmem:[#allocation2] sm:$0x1] %v1725
        %v1727 = vld [vmem:[#allocation3] sm:$0x1]
        %v1728 = vadd.f32 %v1655, %v1656
        %v1729 = vadd.f32 %v1728, %v1657
        %v1730 = vadd.f32 %v1729, %v1658
        %v1731 = vadd.f32 %v1730, %v1659
        %v1732 = vadd.f32 %v1731, %v1660
        %v1733 = vadd.f32 %v1732, %v1661
        %v1734 = vadd.f32 %v1733, %v1662
        %v1735 = vadd.f32 %v1734, %v1663
        %v1736 = vadd.f32 %v1735, %v1664
        %v1737 = vadd.f32 %v1736, %v1665
        %v1738 = vadd.f32 %v1737, %v1666
        %v1739 = vadd.f32 %v1738, %v1667
        %v1740 = vadd.f32 %v1739, %v1668
        %v1741 = vadd.f32 %v1740, %v1669
        %v1742 = vadd.f32 %v1741, %v1670
        %v1743 = vadd.f32 %v1742, %v1671
        %v1744 = vadd.f32 %v1743, %v1672
        %v1745 = vadd.f32 %v1744, %v1673
        %v1746 = vadd.f32 %v1745, %v1674
        %v1747 = vadd.f32 %v1746, %v1675
        %v1748 = vadd.f32 %v1747, %v1676
        %v1749 = vadd.f32 %v1748, %v1677
        %v1750 = vadd.f32 %v1749, %v1678
        %v1751 = vadd.f32 %v1750, %v1679
        %v1752 = vadd.f32 %v1751, %v1680
        %v1753 = vadd.f32 %v1752, %v1681
        %v1754 = vadd.f32 %v1753, %v1682
        %v1755 = vadd.f32 %v1754, %v1683
        %v1756 = vadd.f32 %v1755, %v1684
        %v1757 = vadd.f32 %v1756, %v1685
        %v1758 = vadd.f32 %v1757, %v1686
        %v1759 = vrot.slane %v1758, 4
        %v1760 = vadd.f32 %v1758, %v1759
        %v1761 = vrot.slane %v1760, 2
        %v1762 = vadd.f32 %v1760, %v1761
        %v1763 = vrot.slane %v1762, 1
        %v1764 = vadd.f32 %v1762, %v1763
        %v1765 = vadd.f32 %v1727, %v1764
        %1766 = vst [vmem:[#allocation3] sm:$0x1] %v1765
        // Predicated region
        $region53: #{ppnet_adversarial_forward.1} parent=47 // pred_check
          %p1767 = pneg %p334
        $region54: #{ppnet_adversarial_forward.1} parent=47 // pred_check_branch
          %1769 = sbr.rel (%p1767) target = $region56
        $region55: #{ppnet_adversarial_forward.1} parent=47 // pred_region
          %v1770 = vld [vmem:[#allocation2] sm:$0x1]
          %1771 = vst [vmem:[%s332] sm:$0x1] %v1770
          %v1772 = vld [vmem:[#allocation3] sm:$0x1]
          %1773 = vst [vmem:[%s321] sm:$0x1] %v1772
        $region56: #{ppnet_adversarial_forward.1} parent=47 // pred_fallthru
          _
        %p1774 = scmp.lt.s32.totalorder %s27, 1
        %s1775 = scalar_select %p1774, %s27, 1
        %s1776 = scalar_lea.vmem %s7, %s1775
        %s1777 = sand.u32 %s223, 1
        %s1778 = scalar_lea.sflag [#allocation5], %s1777
        %s1779 = sand.u32 %s223, 1
        %s1780 = scalar_lea.vmem [#allocation4], %s1779
        // Predicated region
        $region57: #{ppnet_adversarial_forward.1} parent=47 // pred_check
          %p1781 = pneg %p207
        $region58: #{ppnet_adversarial_forward.1} parent=47 // pred_check_branch
          %1783 = sbr.rel (%p1781) target = $region60
        $region59: #{ppnet_adversarial_forward.1} parent=47 // pred_region
          _
        $region60: #{ppnet_adversarial_forward.1} parent=47 // pred_fallthru
          _
        // Predicated region
        $region61: #{ppnet_adversarial_forward.1} parent=47 // pred_check
          %p1784 = pneg %p233
        $region62: #{ppnet_adversarial_forward.1} parent=47 // pred_check_branch
          %1786 = sbr.rel (%p1784) target = $region64
        $region63: #{ppnet_adversarial_forward.1} parent=47 // pred_region
          %s1788 = ssub.s32 16, 16
          %1789 = vsyncadd %s1778, %s1788
          %s1790 = smul.addr %s27, 16
          %s1791 = scalar_lea.hbm %s8, %s1790
          %s1793 = sshll.u32 %s1780, 4
          %s1794 = int_to_ptr.vmem [resolvable:$true] %s1793
          %1796 = dma.vmem_to_hbm [thread:$0]  %s1794, 16, %s1791, %s1778
        $region64: #{ppnet_adversarial_forward.1} parent=47 // pred_fallthru
          _
      $region48: #{ppnet_adversarial_forward.1} parent=5 // pred_fallthru
        _
      %p1797 = scmp.le.s32.totalorder 2, %s18
      // Predicated region
      $region65: #{ppnet_adversarial_forward.1} parent=5 // pred_check
        %p1798 = pneg %p1797
      $region66: #{ppnet_adversarial_forward.1} parent=5 // pred_check_branch
        %1800 = sbr.rel (%p1798) target = $region68
      $region67: #{ppnet_adversarial_forward.1} parent=5 // pred_region
        %s1801 = ssub.s32 %s18, 2
        // Predicated region
        $region69: #{ppnet_adversarial_forward.1} parent=67 // pred_check
          %p1802 = pneg %p213
        $region70: #{ppnet_adversarial_forward.1} parent=67 // pred_check_branch
          %1804 = sbr.rel (%p1802) target = $region72
        $region71: #{ppnet_adversarial_forward.1} parent=67 // pred_region
          %p1805 = scmp.lt.s32.totalorder %s29, 1
          %s1806 = scalar_select %p1805, %s29, 1
          %s1807 = scalar_lea.vmem %s7, %s1806
        $region72: #{ppnet_adversarial_forward.1} parent=67 // pred_fallthru
          _
        // Predicated region
        $region73: #{ppnet_adversarial_forward.1} parent=67 // pred_check
          %p1808 = pneg %p239
        $region74: #{ppnet_adversarial_forward.1} parent=67 // pred_check_branch
          %1810 = sbr.rel (%p1808) target = $region76
        $region75: #{ppnet_adversarial_forward.1} parent=67 // pred_region
          %s1811 = sand.u32 %s224, 1
          %s1812 = scalar_lea.sflag [#allocation5], %s1811
          %s1813 = sand.u32 %s224, 1
          %s1814 = scalar_lea.vmem [#allocation4], %s1813
          %1815 = dma.done %s1812, 16
        $region76: #{ppnet_adversarial_forward.1} parent=67 // pred_fallthru
          _
      $region68: #{ppnet_adversarial_forward.1} parent=5 // pred_fallthru
        _
    $region6: #{ppnet_adversarial_forward.1} parent=1 // loop_footer
      %s22 = sadd.s32 1, %s18
    $region7: #{ppnet_adversarial_forward.1} parent=1 // loop_footer_branch
      %17 = sbr.rel target = $region3
    $region8: #{ppnet_adversarial_forward.1} parent=1 // loop_exit
      _
    %1816 = vsyncpa [#allocation5], 1
    %s1817 = scalar_lea.sflag [#allocation5], 1
    %1818 = vsyncpa %s1817, 1

</llo_original>
